<compile_context>
chip_gen: v7x
topology: tpu7x:2x2x1
jax: 0.10.0
libtpu: 0.0.40
codegen_flags: <defaults>
</compile_context>

<pallas_src>
import functools
import math

import jax
import jax.numpy as jnp
import numpy as np
from jax import lax
from jax.experimental import pallas as pl
from jax.experimental.pallas import tpu as pltpu

NEG_SLOPE = 0.01          # nn.LeakyReLU default negative_slope
BN_EPS = 1e-5
FUSED_ROWS_CAP = 256      # dense rows; above this use the tiled two-pass path
MAX_GEMM_TILE_ROWS = 1024 # review: let GEMM row tiles grow to 512-1024 dense rows
MAX_BN_TILE_ROWS = 4096   # BN/act pass is cheap per row -> much larger tiles


def _cdiv(a, b):
    return -(-a // b)


def _round_up(a, b):
    return _cdiv(a, b) * b


def _vmem_budget():
    """(tile-sizing budget, vmem_limit_bytes) — generation aware, safe fallback.

    v7x reports 64 MiB -> budget 32 MiB / limit 48 MiB; v5e/v6e report 128 MiB ->
    budget 64 MiB / limit 96 MiB.  If the query fails we fall back to the v7x
    numbers, which are safe on every generation.
    """
    cap = None
    try:
        info = pltpu.get_tpu_info()
        cap = getattr(info, "vmem_capacity_bytes", None)
    except Exception:
        cap = None
    if not isinstance(cap, int) or cap <= 0:
        cap = 64 * 1024 * 1024
    budget = min(cap // 2, 64 * 1024 * 1024)
    limit = min((cap * 3) // 4, 96 * 1024 * 1024)
    return int(budget), int(limit)


# ----------------------------- Pallas kernels ------------------------------

def _gemm_bn_act_kernel(x_ref, w_ref, o_ref, *, inv_count, cout, log2_f, eps, slope):
    """Fused single-tile path: conv GEMM + batch stats + BN + LeakyReLU.

    x: [R, FK]  bf16 folded im2col patches (F conv rows per dense row)
    w: [FK, Wd] bf16 block-diagonal weight, Wd = F*Cout (lane-dense, multiple of 128)
    o: [R, Wd]  bf16 normalized + activated output
    """
    y = jnp.dot(x_ref[...], w_ref[...], preferred_element_type=jnp.float32)
    s1 = jnp.sum(y, axis=0, keepdims=True)          # [1, Wd] f32
    s2 = jnp.sum(y * y, axis=0, keepdims=True)      # [1, Wd] f32
    # Reduce over the F lane-fold groups with log2(F) circular lane rolls (XLU slot,
    # free under the MXU).  Wd == F*Cout, so rolling by Cout*2^i and adding leaves
    # every lane holding the full per-channel sum, already broadcast back.
    for i in range(log2_f):
        shift = cout << i
        s1 = s1 + pltpu.roll(s1, shift=shift, axis=1)
        s2 = s2 + pltpu.roll(s2, shift=shift, axis=1)
    mean = s1 * inv_count
    var = s2 * inv_count - mean * mean              # biased variance (train mode)
    scale = lax.rsqrt(var + eps)                    # gamma = 1 (default init)
    z = (y - mean) * scale                          # beta  = 0 (default init)
    o_ref[...] = jnp.where(z >= 0, z, slope * z).astype(o_ref.dtype)


def _gemm_stats_kernel(x_ref, w_ref, y_ref, psum_ref, psq_ref):
    """Two-pass path, pass 1: conv GEMM tile + fused per-tile channel statistics.

    x:    [tmd, FK]  bf16   w: [FK, Wd] bf16
    y:    [tmd, Wd]  bf16   lane-dense conv output (inter-pass slab kept in bf16)
    psum: [1,1,Wd]   f32    per-tile partial sum        (per dense lane)
    psq:  [1,1,Wd]   f32    per-tile partial sum of sq.
    """
    y = jnp.dot(x_ref[...], w_ref[...], preferred_element_type=jnp.float32)
    y_ref[...] = y.astype(y_ref.dtype)   # store first; stats below are epilogue filler
    # Stats are taken from the f32 accumulation (not the bf16 ref) for accuracy.
    psum_ref[...] = jnp.sum(y, axis=0, keepdims=True).reshape(psum_ref.shape)
    psq_ref[...] = jnp.sum(y * y, axis=0, keepdims=True).reshape(psq_ref.shape)


def _bn_act_kernel(y_ref, scale_ref, shift_ref, o_ref, *, slope):
    """Two-pass path, pass 2: z = y*scale + shift ; LeakyReLU.  bf16 in / bf16 out."""
    z = y_ref[...].astype(jnp.float32) * scale_ref[...] + shift_ref[...]
    o_ref[...] = jnp.where(z >= 0, z, slope * z).astype(o_ref.dtype)


# ------------------------------- JAX glue -----------------------------------

def _im2col(x_nhwc, k, stride):
    """Extract conv patches. Returns ([N*Ho*Wo, k*k*Cin], (N, Ho, Wo))."""
    # TODO(synk): replace with an in-kernel direct-conv lowering (halo'd row windows,
    # (kh,kw) loop, manual DMA) for large Cin to kill the k^2 HBM expansion.
    N, H, W, C = x_nhwc.shape
    pad = k // 2
    xp = jnp.pad(x_nhwc, ((0, 0), (pad, pad), (pad, pad), (0, 0)))
    Ho = (H + 2 * pad - k) // stride + 1
    Wo = (W + 2 * pad - k) // stride + 1
    cols = []
    for kh in range(k):
        for kw in range(k):
            patch = lax.slice(
                xp,
                (0, kh, kw, 0),
                (N, kh + (Ho - 1) * stride + 1, kw + (Wo - 1) * stride + 1, C),
                (1, stride, stride, 1),
            )
            cols.append(patch)  # [N, Ho, Wo, C], ordered by (kh, kw)
    patches = jnp.concatenate(cols, axis=-1)  # [N, Ho, Wo, k*k*C]
    return patches.reshape(N * Ho * Wo, k * k * C), (N, Ho, Wo)


def conv_bn_lrelu(x_nhwc, weight_oihw, bias, k, stride, eps=BN_EPS):
    """One conv -> BatchNorm(train-mode stats) -> LeakyReLU layer, NHWC, bf16 out."""
    # Cast before patch extraction so the materialized im2col slab is bf16 (half size).
    patches, (N, Ho, Wo) = _im2col(x_nhwc.astype(jnp.bfloat16), k, stride)
    P, K = patches.shape
    Cout = weight_oihw.shape[0]

    # Conv bias is an exact no-op here (train-mode BN, default affine) — see header.
    del bias

    F = 128 // math.gcd(Cout, 128)        # fold F conv rows into lanes (power of 2)
    Wd = F * Cout                         # lane-dense width (always multiple of 128)
    Kp = _round_up(K, 128 // F)           # pad contraction so F*Kp % 128 == 0
    FK = F * Kp
    rows = _cdiv(P, F)                    # dense rows

    budget, vmem_limit = _vmem_budget()

    # weight [Cout,Cin,kh,kw] -> [K,Cout] -> zero-pad K -> block-diagonal [FK, Wd]
    w_mat = jnp.transpose(weight_oihw, (2, 3, 1, 0)).reshape(K, Cout)
    w_mat = jnp.pad(w_mat, ((0, Kp - K), (0, 0)))
    w_bd = jnp.kron(jnp.eye(F, dtype=w_mat.dtype), w_mat).astype(jnp.bfloat16)

    def fold(rpad):
        # Zero rows/cols: with the bias dropped, padded rows give y == 0, which
        # contributes exactly 0 to sum and sum-of-squares (we divide by the true P).
        p = jnp.pad(patches, ((0, rpad * F - P), (0, Kp - K)))
        return p.reshape(rpad, FK)

    cparams = pltpu.CompilerParams(
        dimension_semantics=("parallel",),
        vmem_limit_bytes=vmem_limit,
    )

    rows16 = _round_up(rows, 16)
    fused_bytes = (2 * rows16 * FK * 2 + 2 * FK * Wd * 2
                   + 2 * rows16 * Wd * 2 + rows16 * Wd * 4)

    if rows16 <= FUSED_ROWS_CAP and fused_bytes <= budget:
        # ---- fused single-call path (small feature maps / later blocks) --------
        # Removes the y HBM round-trip, the 2nd launch, and the host-side stats glue.
        # Slab is too small to be worth splitting across v7x's two TensorCores.
        x_dense = fold(rows16)
        kern = functools.partial(
            _gemm_bn_act_kernel, inv_count=1.0 / P, cout=Cout,
            log2_f=F.bit_length() - 1, eps=eps, slope=NEG_SLOPE)
        out = pl.pallas_call(
            kern,
            out_shape=jax.ShapeDtypeStruct((rows16, Wd), jnp.bfloat16),
            grid=(1,),
            in_specs=[pl.BlockSpec((rows16, FK), lambda i: (0, 0)),
                      pl.BlockSpec((FK, Wd), lambda i: (0, 0))],
            out_specs=pl.BlockSpec((rows16, Wd), lambda i: (0, 0)),
            compiler_params=cparams,
            cost_estimate=pl.CostEstimate(
                flops=2 * rows16 * FK * Wd, transcendentals=0,
                bytes_accessed=rows16 * FK * 2 + FK * Wd * 2 + rows16 * Wd * 2),
        )(x_dense, w_bd)
        rpad = rows16
    else:
        # ---- two-pass path: tiled GEMM + partial stats, then BN + LeakyReLU ----
        # VMEM budget counts everything resident: double-buffered bf16 x tile,
        # double-buffered bf16 y tile, the f32 accumulation temporary, and the
        # (double-buffered) block-diagonal weight.
        per_row = 4 * FK + 8 * Wd
        avail = budget - 4 * FK * Wd
        # TODO(synk): K-chunk the contraction (extra "arbitrary" grid axis + f32
        # accumulator scratch) when the weight leaves no room for a useful row tile.
        tmd_max = max(64, min(MAX_GEMM_TILE_ROWS, (avail // per_row) // 16 * 16))
        T = max(2, _cdiv(rows, tmd_max))       # >= 2 tiles so both v7x TCs get work
        if T % 2:
            T += 1                             # even split across the 2 TensorCores
        tmd = _round_up(_cdiv(rows, T), 16)
        rpad = T * tmd
        x_dense = fold(rpad)

        y, psum, psq = pl.pallas_call(
            _gemm_stats_kernel,
            out_shape=(
                jax.ShapeDtypeStruct((rpad, Wd), jnp.bfloat16),
                jax.ShapeDtypeStruct((T, 1, Wd), jnp.float32),
                jax.ShapeDtypeStruct((T, 1, Wd), jnp.float32),
            ),
            grid=(T,),
            in_specs=[pl.BlockSpec((tmd, FK), lambda i: (i, 0)),
                      pl.BlockSpec((FK, Wd), lambda i: (0, 0))],
            out_specs=(
                pl.BlockSpec((tmd, Wd), lambda i: (i, 0)),
                pl.BlockSpec((1, 1, Wd), lambda i: (i, 0, 0)),
                pl.BlockSpec((1, 1, Wd), lambda i: (i, 0, 0)),
            ),
            compiler_params=cparams,
            cost_estimate=pl.CostEstimate(
                flops=2 * rpad * FK * Wd, transcendentals=0,
                bytes_accessed=rpad * FK * 2 + FK * Wd * 2 + rpad * Wd * 2
                + 2 * T * Wd * 4),
        )(x_dense, w_bd)

        # Tiny cross-tile + lane-fold reduction in glue (f32, biased variance).
        s = jnp.sum(psum, axis=(0, 1)).reshape(F, Cout).sum(axis=0)
        ss = jnp.sum(psq, axis=(0, 1)).reshape(F, Cout).sum(axis=0)
        mean = s / P
        var = ss / P - mean * mean
        scale = lax.rsqrt(var + eps)           # gamma = 1 (default init)
        shift = -mean * scale                  # beta  = 0 (default init)
        scale_d = jnp.tile(scale, F).reshape(1, Wd).astype(jnp.float32)
        shift_d = jnp.tile(shift, F).reshape(1, Wd).astype(jnp.float32)

        # The BN/act pass is trivially cheap per row (~12*Wd resident bytes/row),
        # so give it the biggest row tile that divides rpad while keeping >= 2
        # grid steps for the two v7x TensorCores.
        bn_rows_max = min(MAX_BN_TILE_ROWS, max(tmd, budget // (12 * Wd)))
        d = 1
        for cand in range(T // 2, 0, -1):
            if T % cand == 0 and tmd * cand <= bn_rows_max:
                d = cand
                break
        tmd2, T2 = tmd * d, T // d

        out = pl.pallas_call(
            functools.partial(_bn_act_kernel, slope=NEG_SLOPE),
            out_shape=jax.ShapeDtypeStruct((rpad, Wd), jnp.bfloat16),
            grid=(T2,),
            in_specs=[pl.BlockSpec((tmd2, Wd), lambda i: (i, 0)),
                      pl.BlockSpec((1, Wd), lambda i: (0, 0)),
                      pl.BlockSpec((1, Wd), lambda i: (0, 0))],
            out_specs=pl.BlockSpec((tmd2, Wd), lambda i: (i, 0)),
            compiler_params=cparams,
        )(y, scale_d, shift_d)

    out = out.reshape(rpad * F, Cout)[:P]
    return out.reshape(N, Ho, Wo, Cout)


def discrim_block_forward(x_nchw, params, k):
    """Full discrim_block forward. Input/output NCHW (PyTorch convention), f32 out."""
    x = jnp.transpose(x_nchw, (0, 2, 3, 1))  # NCHW -> NHWC
    x = conv_bn_lrelu(x, params["w1"], params["b1"], k, stride=1)
    x = conv_bn_lrelu(x, params["w2"], params["b2"], k, stride=2)
    return jnp.transpose(x, (0, 3, 1, 2)).astype(jnp.float32)  # NHWC -> NCHW


# --------------------------- pure-JAX reference ------------------------------

def _ref_layer(x_nhwc, weight_oihw, bias, k, stride, eps=BN_EPS):
    w_hwio = jnp.transpose(weight_oihw, (2, 3, 1, 0))
    pad = k // 2
    y = lax.conv_general_dilated(
        x_nhwc, w_hwio, window_strides=(stride, stride),
        padding=[(pad, pad), (pad, pad)],
        dimension_numbers=("NHWC", "HWIO", "NHWC"),
    ) + bias.reshape(1, 1, 1, -1)
    mean = jnp.mean(y, axis=(0, 1, 2), keepdims=True)
    var = jnp.mean((y - mean) ** 2, axis=(0, 1, 2), keepdims=True)
    z = (y - mean) / jnp.sqrt(var + eps)
    return jnp.where(z >= 0, z, NEG_SLOPE * z)


def discrim_block_reference(x_nchw, params, k):
    x = jnp.transpose(x_nchw, (0, 2, 3, 1))
    x = _ref_layer(x, params["w1"], params["b1"], k, stride=1)
    x = _ref_layer(x, params["w2"], params["b2"], k, stride=2)
    return jnp.transpose(x, (0, 3, 1, 2))


# ----------------------------------- main ------------------------------------

def _make_params(key, cin, cout, k):
    k_w1, k_w2 = jax.random.split(key, 2)
    # _conv init: weight ~ N(0, 0.02), bias = 0. BN default init handled above.
    return {
        "w1": 0.02 * jax.random.normal(k_w1, (cout, cin, k, k), dtype=jnp.float32),
        "b1": jnp.zeros((cout,), dtype=jnp.float32),
        "w2": 0.02 * jax.random.normal(k_w2, (cout, cout, k, k), dtype=jnp.float32),
        "b2": jnp.zeros((cout,), dtype=jnp.float32),
    }


if __name__ == "__main__":
    key = jax.random.PRNGKey(0)
    k_x1, k_p1, k_x2, k_p2 = jax.random.split(key, 4)

    fwd = jax.jit(discrim_block_forward, static_argnums=(2,))

    # Primary check (small shapes from the module): exercises the fused single-call
    # path (GEMM + in-register batch stats + BN + LeakyReLU) for both layers.
    N, Cin, Cout, H, W, K = 2, 4, 8, 16, 16, 3
    x = jax.random.normal(k_x1, (N, Cin, H, W), dtype=jnp.float32)
    params = _make_params(k_p1, Cin, Cout, K)

    out = jax.block_until_ready(fwd(x, params, K))
    assert out.shape == (N, Cout, H // 2, W // 2), out.shape

    ref = jax.block_until_ready(discrim_block_reference(x, params, K))
    # bf16 MXU inputs + bf16 inter-layer slab (f32 accumulation/statistics).
    np.testing.assert_allclose(np.asarray(out), np.asarray(ref), rtol=2.5e-2, atol=2.5e-2)

    # Secondary check at a larger feature map: layer 1 takes the tiled two-pass
    # path (T >= 2, bf16 y slab, partial stats), layer 2 the fused path.
    H2 = W2 = 64
    x2 = jax.random.normal(k_x2, (N, Cin, H2, W2), dtype=jnp.float32)
    params2 = _make_params(k_p2, Cin, Cout, K)
    out2 = jax.block_until_ready(fwd(x2, params2, K))
    ref2 = jax.block_until_ready(discrim_block_reference(x2, params2, K))
    np.testing.assert_allclose(np.asarray(out2), np.asarray(ref2), rtol=2.5e-2, atol=2.5e-2)

    print("KERNEL_OK")
</pallas_src>

<mosaic_0001>
module attributes {stable_mosaic.version = 11 : i64} {
  func.func @_gemm_bn_act_kernel(%arg0: i32, %arg1: memref<32x640xbf16, #tpu.memory_space<vmem>>, %arg2: memref<640x128xbf16, #tpu.memory_space<vmem>>, %arg3: memref<32x128xbf16, #tpu.memory_space<vmem>>) attributes {dimension_semantics = [#tpu.dimension_semantics<parallel>], iteration_bounds = array<i64: 1>, scalar_prefetch = 0 : i64, scratch_operands = 0 : i64, tpu.core_type = #tpu.core_type<tc>, window_params = [{pipeline_mode = #tpu.pipeline_mode<synchronous>, transform_indices = @transform_0, window_bounds = array<i64: 32, 640>}, {pipeline_mode = #tpu.pipeline_mode<synchronous>, transform_indices = @transform_1, window_bounds = array<i64: 640, 128>}, {pipeline_mode = #tpu.pipeline_mode<synchronous>, transform_indices = @transform_2, window_bounds = array<i64: 32, 128>}]} {
    %c0 = arith.constant 0 : index
    %c0_0 = arith.constant 0 : index
    %0 = vector.load %arg1[%c0, %c0_0] : memref<32x640xbf16, #tpu.memory_space<vmem>>, vector<32x640xbf16>
    %c0_1 = arith.constant 0 : index
    %c0_2 = arith.constant 0 : index
    %1 = vector.load %arg2[%c0_1, %c0_2] : memref<640x128xbf16, #tpu.memory_space<vmem>>, vector<640x128xbf16>
    %cst = arith.constant dense<0.000000e+00> : vector<32x128xf32>
    %2 = tpu.matmul %0, %1, %cst {dimension_numbers = #tpu.dot_dimension_numbers<[1], [0], [0], [1], [0, 0, 1, 1], [], []>} : vector<32x640xbf16>, vector<640x128xbf16>, vector<32x128xf32> -> vector<32x128xf32>
    %cst_3 = arith.constant dense<0.000000e+00> : vector<128xf32>
    %3 = vector.multi_reduction <add>, %2, %cst_3 [0] : vector<32x128xf32> to vector<128xf32>
    %4 = vector.shape_cast %3 : vector<128xf32> to vector<1x128xf32>
    %5 = arith.mulf %2, %2 : vector<32x128xf32>
    %cst_4 = arith.constant dense<0.000000e+00> : vector<128xf32>
    %6 = vector.multi_reduction <add>, %5, %cst_4 [0] : vector<32x128xf32> to vector<128xf32>
    %7 = vector.shape_cast %6 : vector<128xf32> to vector<1x128xf32>
    %c8_i32 = arith.constant 8 : i32
    %8 = tpu.dynamic_rotate %4 by %c8_i32 dim 1 : vector<1x128xf32>, i32 -> vector<1x128xf32>
    %9 = arith.addf %4, %8 : vector<1x128xf32>
    %c8_i32_5 = arith.constant 8 : i32
    %10 = tpu.dynamic_rotate %7 by %c8_i32_5 dim 1 : vector<1x128xf32>, i32 -> vector<1x128xf32>
    %11 = arith.addf %7, %10 : vector<1x128xf32>
    %c16_i32 = arith.constant 16 : i32
    %12 = tpu.dynamic_rotate %9 by %c16_i32 dim 1 : vector<1x128xf32>, i32 -> vector<1x128xf32>
    %13 = arith.addf %9, %12 : vector<1x128xf32>
    %c16_i32_6 = arith.constant 16 : i32
    %14 = tpu.dynamic_rotate %11 by %c16_i32_6 dim 1 : vector<1x128xf32>, i32 -> vector<1x128xf32>
    %15 = arith.addf %11, %14 : vector<1x128xf32>
    %c32_i32 = arith.constant 32 : i32
    %16 = tpu.dynamic_rotate %13 by %c32_i32 dim 1 : vector<1x128xf32>, i32 -> vector<1x128xf32>
    %17 = arith.addf %13, %16 : vector<1x128xf32>
    %c32_i32_7 = arith.constant 32 : i32
    %18 = tpu.dynamic_rotate %15 by %c32_i32_7 dim 1 : vector<1x128xf32>, i32 -> vector<1x128xf32>
    %19 = arith.addf %15, %18 : vector<1x128xf32>
    %c64_i32 = arith.constant 64 : i32
    %20 = tpu.dynamic_rotate %17 by %c64_i32 dim 1 : vector<1x128xf32>, i32 -> vector<1x128xf32>
    %21 = arith.addf %17, %20 : vector<1x128xf32>
    %c64_i32_8 = arith.constant 64 : i32
    %22 = tpu.dynamic_rotate %19 by %c64_i32_8 dim 1 : vector<1x128xf32>, i32 -> vector<1x128xf32>
    %23 = arith.addf %19, %22 : vector<1x128xf32>
    %cst_9 = arith.constant 0.001953125 : f32
    %24 = vector.broadcast %cst_9 : f32 to vector<1x128xf32>
    %25 = arith.mulf %21, %24 : vector<1x128xf32>
    %cst_10 = arith.constant 0.001953125 : f32
    %26 = vector.broadcast %cst_10 : f32 to vector<1x128xf32>
    %27 = arith.mulf %23, %26 : vector<1x128xf32>
    %28 = arith.mulf %25, %25 : vector<1x128xf32>
    %29 = arith.subf %27, %28 : vector<1x128xf32>
    %cst_11 = arith.constant 9.99999974E-6 : f32
    %30 = vector.broadcast %cst_11 : f32 to vector<1x128xf32>
    %31 = arith.addf %29, %30 : vector<1x128xf32>
    %32 = math.rsqrt %31 : vector<1x128xf32>
    %33 = vector.broadcast %25 : vector<1x128xf32> to vector<32x128xf32>
    %34 = arith.subf %2, %33 : vector<32x128xf32>
    %35 = vector.broadcast %32 : vector<1x128xf32> to vector<32x128xf32>
    %36 = arith.mulf %34, %35 : vector<32x128xf32>
    %cst_12 = arith.constant 0.000000e+00 : f32
    %37 = vector.broadcast %cst_12 : f32 to vector<32x128xf32>
    %38 = arith.cmpf oge, %36, %37 : vector<32x128xf32>
    %cst_13 = arith.constant 0.00999999977 : f32
    %39 = vector.broadcast %cst_13 : f32 to vector<32x128xf32>
    %40 = arith.mulf %39, %36 : vector<32x128xf32>
    %41 = arith.select %38, %36, %40 : vector<32x128xi1>, vector<32x128xf32>
    %42 = arith.truncf %41 : vector<32x128xf32> to vector<32x128xbf16>
    %c0_14 = arith.constant 0 : index
    %c0_15 = arith.constant 0 : index
    %43 = vector.load %arg3[%c0_14, %c0_15] : memref<32x128xbf16, #tpu.memory_space<vmem>>, vector<32x128xbf16>
    tpu.vector_store %arg3[%c0_14, %c0_15], %42 {strides = array<i32>} : memref<32x128xbf16, #tpu.memory_space<vmem>>, vector<32x128xbf16>,
    return
  }
  func.func @transform_0(%arg0: i32) -> (i32, i32) {
    %c0_i32 = arith.constant 0 : i32
    %c0_i32_0 = arith.constant 0 : i32
    %c0_i32_1 = arith.constant 0 : i32
    return %c0_i32, %c0_i32_0 : i32, i32
  }
  func.func @transform_1(%arg0: i32) -> (i32, i32) {
    %c0_i32 = arith.constant 0 : i32
    %c0_i32_0 = arith.constant 0 : i32
    %c0_i32_1 = arith.constant 0 : i32
    return %c0_i32, %c0_i32_0 : i32, i32
  }
  func.func @transform_2(%arg0: i32) -> (i32, i32) {
    %c0_i32 = arith.constant 0 : i32
    %c0_i32_0 = arith.constant 0 : i32
    %c0_i32_1 = arith.constant 0 : i32
    return %c0_i32, %c0_i32_0 : i32, i32
  }
}

module attributes {stable_mosaic.version = 11 : i64} {
  func.func @_gemm_bn_act_kernel(%arg0: i32, %arg1: memref<16x1152xbf16, #tpu.memory_space<vmem>>, %arg2: memref<1152x128xbf16, #tpu.memory_space<vmem>>, %arg3: memref<16x128xbf16, #tpu.memory_space<vmem>>) attributes {dimension_semantics = [#tpu.dimension_semantics<parallel>], iteration_bounds = array<i64: 1>, scalar_prefetch = 0 : i64, scratch_operands = 0 : i64, tpu.core_type = #tpu.core_type<tc>, window_params = [{pipeline_mode = #tpu.pipeline_mode<synchronous>, transform_indices = @transform_0, window_bounds = array<i64: 16, 1152>}, {pipeline_mode = #tpu.pipeline_mode<synchronous>, transform_indices = @transform_1, window_bounds = array<i64: 1152, 128>}, {pipeline_mode = #tpu.pipeline_mode<synchronous>, transform_indices = @transform_2, window_bounds = array<i64: 16, 128>}]} {
    %c0 = arith.constant 0 : index
    %c0_0 = arith.constant 0 : index
    %0 = vector.load %arg1[%c0, %c0_0] : memref<16x1152xbf16, #tpu.memory_space<vmem>>, vector<16x1152xbf16>
    %c0_1 = arith.constant 0 : index
    %c0_2 = arith.constant 0 : index
    %1 = vector.load %arg2[%c0_1, %c0_2] : memref<1152x128xbf16, #tpu.memory_space<vmem>>, vector<1152x128xbf16>
    %cst = arith.constant dense<0.000000e+00> : vector<16x128xf32>
    %2 = tpu.matmul %0, %1, %cst {dimension_numbers = #tpu.dot_dimension_numbers<[1], [0], [0], [1], [0, 0, 1, 1], [], []>} : vector<16x1152xbf16>, vector<1152x128xbf16>, vector<16x128xf32> -> vector<16x128xf32>
    %cst_3 = arith.constant dense<0.000000e+00> : vector<128xf32>
    %3 = vector.multi_reduction <add>, %2, %cst_3 [0] : vector<16x128xf32> to vector<128xf32>
    %4 = vector.shape_cast %3 : vector<128xf32> to vector<1x128xf32>
    %5 = arith.mulf %2, %2 : vector<16x128xf32>
    %cst_4 = arith.constant dense<0.000000e+00> : vector<128xf32>
    %6 = vector.multi_reduction <add>, %5, %cst_4 [0] : vector<16x128xf32> to vector<128xf32>
    %7 = vector.shape_cast %6 : vector<128xf32> to vector<1x128xf32>
    %c8_i32 = arith.constant 8 : i32
    %8 = tpu.dynamic_rotate %4 by %c8_i32 dim 1 : vector<1x128xf32>, i32 -> vector<1x128xf32>
    %9 = arith.addf %4, %8 : vector<1x128xf32>
    %c8_i32_5 = arith.constant 8 : i32
    %10 = tpu.dynamic_rotate %7 by %c8_i32_5 dim 1 : vector<1x128xf32>, i32 -> vector<1x128xf32>
    %11 = arith.addf %7, %10 : vector<1x128xf32>
    %c16_i32 = arith.constant 16 : i32
    %12 = tpu.dynamic_rotate %9 by %c16_i32 dim 1 : vector<1x128xf32>, i32 -> vector<1x128xf32>
    %13 = arith.addf %9, %12 : vector<1x128xf32>
    %c16_i32_6 = arith.constant 16 : i32
    %14 = tpu.dynamic_rotate %11 by %c16_i32_6 dim 1 : vector<1x128xf32>, i32 -> vector<1x128xf32>
    %15 = arith.addf %11, %14 : vector<1x128xf32>
    %c32_i32 = arith.constant 32 : i32
    %16 = tpu.dynamic_rotate %13 by %c32_i32 dim 1 : vector<1x128xf32>, i32 -> vector<1x128xf32>
    %17 = arith.addf %13, %16 : vector<1x128xf32>
    %c32_i32_7 = arith.constant 32 : i32
    %18 = tpu.dynamic_rotate %15 by %c32_i32_7 dim 1 : vector<1x128xf32>, i32 -> vector<1x128xf32>
    %19 = arith.addf %15, %18 : vector<1x128xf32>
    %c64_i32 = arith.constant 64 : i32
    %20 = tpu.dynamic_rotate %17 by %c64_i32 dim 1 : vector<1x128xf32>, i32 -> vector<1x128xf32>
    %21 = arith.addf %17, %20 : vector<1x128xf32>
    %c64_i32_8 = arith.constant 64 : i32
    %22 = tpu.dynamic_rotate %19 by %c64_i32_8 dim 1 : vector<1x128xf32>, i32 -> vector<1x128xf32>
    %23 = arith.addf %19, %22 : vector<1x128xf32>
    %cst_9 = arith.constant 7.812500e-03 : f32
    %24 = vector.broadcast %cst_9 : f32 to vector<1x128xf32>
    %25 = arith.mulf %21, %24 : vector<1x128xf32>
    %cst_10 = arith.constant 7.812500e-03 : f32
    %26 = vector.broadcast %cst_10 : f32 to vector<1x128xf32>
    %27 = arith.mulf %23, %26 : vector<1x128xf32>
    %28 = arith.mulf %25, %25 : vector<1x128xf32>
    %29 = arith.subf %27, %28 : vector<1x128xf32>
    %cst_11 = arith.constant 9.99999974E-6 : f32
    %30 = vector.broadcast %cst_11 : f32 to vector<1x128xf32>
    %31 = arith.addf %29, %30 : vector<1x128xf32>
    %32 = math.rsqrt %31 : vector<1x128xf32>
    %33 = vector.broadcast %25 : vector<1x128xf32> to vector<16x128xf32>
    %34 = arith.subf %2, %33 : vector<16x128xf32>
    %35 = vector.broadcast %32 : vector<1x128xf32> to vector<16x128xf32>
    %36 = arith.mulf %34, %35 : vector<16x128xf32>
    %cst_12 = arith.constant 0.000000e+00 : f32
    %37 = vector.broadcast %cst_12 : f32 to vector<16x128xf32>
    %38 = arith.cmpf oge, %36, %37 : vector<16x128xf32>
    %cst_13 = arith.constant 0.00999999977 : f32
    %39 = vector.broadcast %cst_13 : f32 to vector<16x128xf32>
    %40 = arith.mulf %39, %36 : vector<16x128xf32>
    %41 = arith.select %38, %36, %40 : vector<16x128xi1>, vector<16x128xf32>
    %42 = arith.truncf %41 : vector<16x128xf32> to vector<16x128xbf16>
    %c0_14 = arith.constant 0 : index
    %c0_15 = arith.constant 0 : index
    %43 = vector.load %arg3[%c0_14, %c0_15] : memref<16x128xbf16, #tpu.memory_space<vmem>>, vector<16x128xbf16>
    tpu.vector_store %arg3[%c0_14, %c0_15], %42 {strides = array<i32>} : memref<16x128xbf16, #tpu.memory_space<vmem>>, vector<16x128xbf16>,
    return
  }
  func.func @transform_0(%arg0: i32) -> (i32, i32) {
    %c0_i32 = arith.constant 0 : i32
    %c0_i32_0 = arith.constant 0 : i32
    %c0_i32_1 = arith.constant 0 : i32
    return %c0_i32, %c0_i32_0 : i32, i32
  }
  func.func @transform_1(%arg0: i32) -> (i32, i32) {
    %c0_i32 = arith.constant 0 : i32
    %c0_i32_0 = arith.constant 0 : i32
    %c0_i32_1 = arith.constant 0 : i32
    return %c0_i32, %c0_i32_0 : i32, i32
  }
  func.func @transform_2(%arg0: i32) -> (i32, i32) {
    %c0_i32 = arith.constant 0 : i32
    %c0_i32_0 = arith.constant 0 : i32
    %c0_i32_1 = arith.constant 0 : i32
    return %c0_i32, %c0_i32_0 : i32, i32
  }
}

</mosaic_0001>

<llo_original>
// kernel: discrim_block_forward.2
$region0: #{discrim_block_forward.2}
  #allocation0 [shape = 'u32[]', space=smem, size = 0x4, offset = 0x4, fixed_abs, tag = 'smem constant byte address 0x4 - core index']
  #allocation1 [shape = 'u32[144,128]{1,0:T(1,128)}', space=vmem, size = 0x12000, scoped, tag = 'internal scratch']
  %s0 = inlined_call_operand.vmem [shape: bf16[32,640], index: 0, kind: input, shape index: {}]
  %s1 = inlined_call_operand.vmem [shape: bf16[640,128], index: 1, kind: input, shape index: {}]
  %s2 = inlined_call_operand.vmem [shape: bf16[32,128], index: 2, kind: output, shape index: {}]
  %s3 = sld [smem:[#allocation0]]
  $region18: #{discrim_block_forward.2} parent=0
    _
  %s5 = ssub.s32 1, %s3
  %s6 = scalar_select 0, %s5, %s3
  // Predicated region
  $region2: #{discrim_block_forward.2} parent=0 // pred_check
    _
  $region3: #{discrim_block_forward.2} parent=0 // pred_check_branch
    %8 = sbr.rel (0) target = $region5
  $region4: #{discrim_block_forward.2} parent=0 // pred_region
    _
  $region5: #{discrim_block_forward.2} parent=0 // pred_fallthru
    _
  // Predicated region
  $region6: #{discrim_block_forward.2} parent=0 // pred_check
    _
  $region7: #{discrim_block_forward.2} parent=0 // pred_check_branch
    %10 = sbr.rel (0) target = $region9
  $region8: #{discrim_block_forward.2} parent=0 // pred_region
    _
  $region9: #{discrim_block_forward.2} parent=0 // pred_fallthru
    _
  %v12 = vld [vmem:[%s0] sm:$0xff]
  %v13 = vld [vmem:[%s0 + $0x8] sm:$0xff]
  %v14 = vld [vmem:[%s0 + $0x10] sm:$0xf]
  %v15 = vld [vmem:[%s0 + $0x14] sm:$0xff]
  %v16 = vld [vmem:[%s0 + $0x1c] sm:$0xff]
  %v17 = vld [vmem:[%s0 + $0x24] sm:$0xf]
  %v18 = vld [vmem:[%s0 + $0x28] sm:$0xff]
  %v19 = vld [vmem:[%s0 + $0x30] sm:$0xff]
  %v20 = vld [vmem:[%s0 + $0x38] sm:$0xf]
  %v21 = vld [vmem:[%s0 + $0x3c] sm:$0xff]
  %v22 = vld [vmem:[%s0 + $0x44] sm:$0xff]
  %v23 = vld [vmem:[%s0 + $0x4c] sm:$0xf]
  %v24 = vld [vmem:[%s1] sm:$0xf]
  %v25 = vld [vmem:[%s1 + $0x4] sm:$0xf]
  %v26 = vld [vmem:[%s1 + $0x8] sm:$0xf]
  %v27 = vld [vmem:[%s1 + $0xc] sm:$0xf]
  %v28 = vld [vmem:[%s1 + $0x10] sm:$0xf]
  %v29 = vld [vmem:[%s1 + $0x14] sm:$0xf]
  %v30 = vld [vmem:[%s1 + $0x18] sm:$0xf]
  %v31 = vld [vmem:[%s1 + $0x1c] sm:$0xf]
  %v32 = vld [vmem:[%s1 + $0x20] sm:$0xf]
  %v33 = vld [vmem:[%s1 + $0x24] sm:$0xf]
  %v34 = vld [vmem:[%s1 + $0x28] sm:$0xf]
  %v35 = vld [vmem:[%s1 + $0x2c] sm:$0xf]
  %v36 = vld [vmem:[%s1 + $0x30] sm:$0xf]
  %v37 = vld [vmem:[%s1 + $0x34] sm:$0xf]
  %v38 = vld [vmem:[%s1 + $0x38] sm:$0xf]
  %v39 = vld [vmem:[%s1 + $0x3c] sm:$0xf]
  %v40 = vld [vmem:[%s1 + $0x40] sm:$0xf]
  %v41 = vld [vmem:[%s1 + $0x44] sm:$0xf]
  %v42 = vld [vmem:[%s1 + $0x48] sm:$0xf]
  %v43 = vld [vmem:[%s1 + $0x4c] sm:$0xf]
  %v44 = vld [vmem:[%s1 + $0x50] sm:$0xf]
  %v45 = vld [vmem:[%s1 + $0x54] sm:$0xf]
  %v46 = vld [vmem:[%s1 + $0x58] sm:$0xf]
  %v47 = vld [vmem:[%s1 + $0x5c] sm:$0xf]
  %v48 = vld [vmem:[%s1 + $0x60] sm:$0xf]
  %v49 = vld [vmem:[%s1 + $0x64] sm:$0xf]
  %v50 = vld [vmem:[%s1 + $0x68] sm:$0xf]
  %v51 = vld [vmem:[%s1 + $0x6c] sm:$0xf]
  %v52 = vld [vmem:[%s1 + $0x70] sm:$0xf]
  %v53 = vld [vmem:[%s1 + $0x74] sm:$0xf]
  %v54 = vld [vmem:[%s1 + $0x78] sm:$0xf]
  %v55 = vld [vmem:[%s1 + $0x7c] sm:$0xf]
  %v56 = vld [vmem:[%s1 + $0x80] sm:$0xf]
  %v57 = vld [vmem:[%s1 + $0x84] sm:$0xf]
  %v58 = vld [vmem:[%s1 + $0x88] sm:$0xf]
  %v59 = vld [vmem:[%s1 + $0x8c] sm:$0xf]
  %v60 = vld [vmem:[%s1 + $0x90] sm:$0xf]
  %v61 = vld [vmem:[%s1 + $0x94] sm:$0xf]
  %v62 = vld [vmem:[%s1 + $0x98] sm:$0xf]
  %v63 = vld [vmem:[%s1 + $0x9c] sm:$0xf]
  %v64 = vld [vmem:[%s1 + $0xa0] sm:$0xf]
  %v65 = vld [vmem:[%s1 + $0xa4] sm:$0xf]
  %v66 = vld [vmem:[%s1 + $0xa8] sm:$0xf]
  %v67 = vld [vmem:[%s1 + $0xac] sm:$0xf]
  %v68 = vld [vmem:[%s1 + $0xb0] sm:$0xf]
  %v69 = vld [vmem:[%s1 + $0xb4] sm:$0xf]
  %v70 = vld [vmem:[%s1 + $0xb8] sm:$0xf]
  %v71 = vld [vmem:[%s1 + $0xbc] sm:$0xf]
  %v72 = vld [vmem:[%s1 + $0xc0] sm:$0xf]
  %v73 = vld [vmem:[%s1 + $0xc4] sm:$0xf]
  %v74 = vld [vmem:[%s1 + $0xc8] sm:$0xf]
  %v75 = vld [vmem:[%s1 + $0xcc] sm:$0xf]
  %v76 = vld [vmem:[%s1 + $0xd0] sm:$0xf]
  %v77 = vld [vmem:[%s1 + $0xd4] sm:$0xf]
  %v78 = vld [vmem:[%s1 + $0xd8] sm:$0xf]
  %v79 = vld [vmem:[%s1 + $0xdc] sm:$0xf]
  %v80 = vld [vmem:[%s1 + $0xe0] sm:$0xf]
  %v81 = vld [vmem:[%s1 + $0xe4] sm:$0xf]
  %v82 = vld [vmem:[%s1 + $0xe8] sm:$0xf]
  %v83 = vld [vmem:[%s1 + $0xec] sm:$0xf]
  %v84 = vld [vmem:[%s1 + $0xf0] sm:$0xf]
  %v85 = vld [vmem:[%s1 + $0xf4] sm:$0xf]
  %v86 = vld [vmem:[%s1 + $0xf8] sm:$0xf]
  %v87 = vld [vmem:[%s1 + $0xfc] sm:$0xf]
  %v88 = vld [vmem:[%s1 + $0x100] sm:$0xf]
  %v89 = vld [vmem:[%s1 + $0x104] sm:$0xf]
  %v90 = vld [vmem:[%s1 + $0x108] sm:$0xf]
  %v91 = vld [vmem:[%s1 + $0x10c] sm:$0xf]
  %v92 = vld [vmem:[%s1 + $0x110] sm:$0xf]
  %v93 = vld [vmem:[%s1 + $0x114] sm:$0xf]
  %v94 = vld [vmem:[%s1 + $0x118] sm:$0xf]
  %v95 = vld [vmem:[%s1 + $0x11c] sm:$0xf]
  %v96 = vld [vmem:[%s1 + $0x120] sm:$0xf]
  %v97 = vld [vmem:[%s1 + $0x124] sm:$0xf]
  %v98 = vld [vmem:[%s1 + $0x128] sm:$0xf]
  %v99 = vld [vmem:[%s1 + $0x12c] sm:$0xf]
  %v100 = vld [vmem:[%s1 + $0x130] sm:$0xf]
  %v101 = vld [vmem:[%s1 + $0x134] sm:$0xf]
  %v102 = vld [vmem:[%s1 + $0x138] sm:$0xf]
  %v103 = vld [vmem:[%s1 + $0x13c] sm:$0xf]
  %v116 = vunpack.c.l.b16 %v12
  %v117 = vunpack.c.h.b16 %v12
  %v118 = vunpack.c.l.b16 %v13
  %v119 = vunpack.c.h.b16 %v13
  %v120 = vunpack.c.l.b16 %v14
  %v121 = vunpack.c.l.b16 %v15
  %v122 = vunpack.c.h.b16 %v15
  %v123 = vunpack.c.l.b16 %v16
  %v124 = vunpack.c.h.b16 %v16
  %v125 = vunpack.c.l.b16 %v17
  %v126 = vunpack.c.l.b16 %v18
  %v127 = vunpack.c.h.b16 %v18
  %v128 = vunpack.c.l.b16 %v19
  %v129 = vunpack.c.h.b16 %v19
  %v130 = vunpack.c.l.b16 %v20
  %v131 = vunpack.c.l.b16 %v21
  %v132 = vunpack.c.h.b16 %v21
  %v133 = vunpack.c.l.b16 %v22
  %v134 = vunpack.c.h.b16 %v22
  %v135 = vunpack.c.l.b16 %v23
  %v136 = vpack.c.b16 %v121, %v116
  %v137 = vpack.c.b16 %v122, %v117
  %v138 = vpack.c.b16 %v123, %v118
  %v139 = vpack.c.b16 %v124, %v119
  %v140 = vpack.c.b16 %v125, %v120
  %v141 = vpack.c.b16 %v131, %v126
  %v142 = vpack.c.b16 %v132, %v127
  %v143 = vpack.c.b16 %v133, %v128
  %v144 = vpack.c.b16 %v134, %v129
  %v145 = vpack.c.b16 %v135, %v130
  %v236 = vunpack.c.l.b16 %v24
  %v237 = vunpack.c.l.b16 %v25
  %v238 = vunpack.c.l.b16 %v26
  %v239 = vunpack.c.l.b16 %v27
  %v240 = vunpack.c.l.b16 %v28
  %v241 = vunpack.c.l.b16 %v29
  %v242 = vunpack.c.l.b16 %v30
  %v243 = vunpack.c.l.b16 %v31
  %v244 = vunpack.c.l.b16 %v32
  %v245 = vunpack.c.l.b16 %v33
  %v246 = vunpack.c.l.b16 %v34
  %v247 = vunpack.c.l.b16 %v35
  %v248 = vunpack.c.l.b16 %v36
  %v249 = vunpack.c.l.b16 %v37
  %v250 = vunpack.c.l.b16 %v38
  %v251 = vunpack.c.l.b16 %v39
  %v252 = vunpack.c.l.b16 %v40
  %v253 = vunpack.c.l.b16 %v41
  %v254 = vunpack.c.l.b16 %v42
  %v255 = vunpack.c.l.b16 %v43
  %v256 = vunpack.c.l.b16 %v44
  %v257 = vunpack.c.l.b16 %v45
  %v258 = vunpack.c.l.b16 %v46
  %v259 = vunpack.c.l.b16 %v47
  %v260 = vunpack.c.l.b16 %v48
  %v261 = vunpack.c.l.b16 %v49
  %v262 = vunpack.c.l.b16 %v50
  %v263 = vunpack.c.l.b16 %v51
  %v264 = vunpack.c.l.b16 %v52
  %v265 = vunpack.c.l.b16 %v53
  %v266 = vunpack.c.l.b16 %v54
  %v267 = vunpack.c.l.b16 %v55
  %v268 = vunpack.c.l.b16 %v56
  %v269 = vunpack.c.l.b16 %v57
  %v270 = vunpack.c.l.b16 %v58
  %v271 = vunpack.c.l.b16 %v59
  %v272 = vunpack.c.l.b16 %v60
  %v273 = vunpack.c.l.b16 %v61
  %v274 = vunpack.c.l.b16 %v62
  %v275 = vunpack.c.l.b16 %v63
  %v276 = vunpack.c.l.b16 %v64
  %v277 = vunpack.c.l.b16 %v65
  %v278 = vunpack.c.l.b16 %v66
  %v279 = vunpack.c.l.b16 %v67
  %v280 = vunpack.c.l.b16 %v68
  %v281 = vunpack.c.l.b16 %v69
  %v282 = vunpack.c.l.b16 %v70
  %v283 = vunpack.c.l.b16 %v71
  %v284 = vunpack.c.l.b16 %v72
  %v285 = vunpack.c.l.b16 %v73
  %v286 = vunpack.c.l.b16 %v74
  %v287 = vunpack.c.l.b16 %v75
  %v288 = vunpack.c.l.b16 %v76
  %v289 = vunpack.c.l.b16 %v77
  %v290 = vunpack.c.l.b16 %v78
  %v291 = vunpack.c.l.b16 %v79
  %v292 = vunpack.c.l.b16 %v80
  %v293 = vunpack.c.l.b16 %v81
  %v294 = vunpack.c.l.b16 %v82
  %v295 = vunpack.c.l.b16 %v83
  %v296 = vunpack.c.l.b16 %v84
  %v297 = vunpack.c.l.b16 %v85
  %v298 = vunpack.c.l.b16 %v86
  %v299 = vunpack.c.l.b16 %v87
  %v300 = vunpack.c.l.b16 %v88
  %v301 = vunpack.c.l.b16 %v89
  %v302 = vunpack.c.l.b16 %v90
  %v303 = vunpack.c.l.b16 %v91
  %v304 = vunpack.c.l.b16 %v92
  %v305 = vunpack.c.l.b16 %v93
  %v306 = vunpack.c.l.b16 %v94
  %v307 = vunpack.c.l.b16 %v95
  %v308 = vunpack.c.l.b16 %v96
  %v309 = vunpack.c.l.b16 %v97
  %v310 = vunpack.c.l.b16 %v98
  %v311 = vunpack.c.l.b16 %v99
  %v312 = vunpack.c.l.b16 %v100
  %v313 = vunpack.c.l.b16 %v101
  %v314 = vunpack.c.l.b16 %v102
  %v315 = vunpack.c.l.b16 %v103
  %v316 = vpack.c.b16 %v237, %v236
  %v317 = vpack.c.b16 %v239, %v238
  %v318 = vpack.c.b16 %v241, %v240
  %v319 = vpack.c.b16 %v243, %v242
  %v320 = vpack.c.b16 %v245, %v244
  %v321 = vpack.c.b16 %v247, %v246
  %v322 = vpack.c.b16 %v249, %v248
  %v323 = vpack.c.b16 %v251, %v250
  %v324 = vpack.c.b16 %v253, %v252
  %v325 = vpack.c.b16 %v255, %v254
  %v326 = vpack.c.b16 %v257, %v256
  %v327 = vpack.c.b16 %v259, %v258
  %v328 = vpack.c.b16 %v261, %v260
  %v329 = vpack.c.b16 %v263, %v262
  %v330 = vpack.c.b16 %v265, %v264
  %v331 = vpack.c.b16 %v267, %v266
  %v332 = vpack.c.b16 %v269, %v268
  %v333 = vpack.c.b16 %v271, %v270
  %v334 = vpack.c.b16 %v273, %v272
  %v335 = vpack.c.b16 %v275, %v274
  %v336 = vpack.c.b16 %v277, %v276
  %v337 = vpack.c.b16 %v279, %v278
  %v338 = vpack.c.b16 %v281, %v280
  %v339 = vpack.c.b16 %v283, %v282
  %v340 = vpack.c.b16 %v285, %v284
  %v341 = vpack.c.b16 %v287, %v286
  %v342 = vpack.c.b16 %v289, %v288
  %v343 = vpack.c.b16 %v291, %v290
  %v344 = vpack.c.b16 %v293, %v292
  %v345 = vpack.c.b16 %v295, %v294
  %v346 = vpack.c.b16 %v297, %v296
  %v347 = vpack.c.b16 %v299, %v298
  %v348 = vpack.c.b16 %v301, %v300
  %v349 = vpack.c.b16 %v303, %v302
  %v350 = vpack.c.b16 %v305, %v304
  %v351 = vpack.c.b16 %v307, %v306
  %v352 = vpack.c.b16 %v309, %v308
  %v353 = vpack.c.b16 %v311, %v310
  %v354 = vpack.c.b16 %v313, %v312
  %v355 = vpack.c.b16 %v315, %v314
  %396 = vmatprep.subr.bf16.mxu0 0
  %397 = vmatpush1.bf16.msra.mxu0 %v316
  %398 = vmatprep.subr.bf16.mxu0 0
  %399 = vmatpush1.bf16.msra.mxu0 %v317
  %400 = vmatprep.subr.bf16.mxu0 0
  %401 = vmatpush1.bf16.msra.mxu0 %v318
  %402 = vmatprep.subr.bf16.mxu0 0
  %403 = vmatpush1.bf16.msra.mxu0 %v319
  %404 = vmatprep.subr.bf16.mxu0 0
  %405 = vmatpush1.bf16.msra.mxu0 %v320
  %406 = vmatprep.subr.bf16.mxu0 0
  %407 = vmatpush1.bf16.msra.mxu0 %v321
  %408 = vmatprep.subr.bf16.mxu0 0
  %409 = vmatpush1.bf16.msra.mxu0 %v322
  %410 = vmatprep.subr.bf16.mxu0 0
  %411 = vmatpush1.bf16.msra.mxu0 %v323
  %412 = vmatprep.subr.bf16.mxu0 0
  %413 = vmatpush1.bf16.msra.mxu0 %v324
  %414 = vmatprep.subr.bf16.mxu0 0
  %415 = vmatpush1.bf16.msra.mxu0 %v325
  %416 = vmatprep.subr.bf16.mxu0 0
  %417 = vmatpush1.bf16.msra.mxu0 %v326
  %418 = vmatprep.subr.bf16.mxu0 0
  %419 = vmatpush1.bf16.msra.mxu0 %v327
  %420 = vmatprep.subr.bf16.mxu0 0
  %421 = vmatpush1.bf16.msra.mxu0 %v328
  %422 = vmatprep.subr.bf16.mxu0 0
  %423 = vmatpush1.bf16.msra.mxu0 %v329
  %424 = vmatprep.subr.bf16.mxu0 0
  %425 = vmatpush1.bf16.msra.mxu0 %v330
  %426 = vmatprep.subr.bf16.mxu0 0
  %427 = vmatpush1.bf16.msra.mxu0 %v331
  %428 = vmatprep.mubr.bf16.mxu0 %v137
  %429 = vmatmul.mubr.bf16.gmra.mrb[0].mxu0 %v136
  %v430 = vpop.f32.mrb[0].mxu0
  %v431 = vadd.f32 0.0, %v430
  %v432 = vpop.f32.mrb[0].mxu0
  %v433 = vpop.f32.mrb[0].mxu0
  %v434 = vadd.f32 0.0, %v433
  %v435 = vpop.f32.mrb[0].mxu0
  %436 = vmatprep.mubr.bf16.mxu0 %v142
  %437 = vmatmul.mubr.bf16.gmra.mrb[0].mxu0 %v141
  %v438 = vpop.f32.mrb[0].mxu0
  %v439 = vadd.f32 0.0, %v438
  %v440 = vpop.f32.mrb[0].mxu0
  %v441 = vpop.f32.mrb[0].mxu0
  %v442 = vadd.f32 0.0, %v441
  %v443 = vpop.f32.mrb[0].mxu0
  %444 = vdwg.mxu0
  %445 = vmatprep.subr.bf16.mxu0 0
  %446 = vmatpush1.bf16.msra.mxu0 %v332
  %447 = vmatprep.subr.bf16.mxu0 0
  %448 = vmatpush1.bf16.msra.mxu0 %v333
  %449 = vmatprep.subr.bf16.mxu0 0
  %450 = vmatpush1.bf16.msra.mxu0 %v334
  %451 = vmatprep.subr.bf16.mxu0 0
  %452 = vmatpush1.bf16.msra.mxu0 %v335
  %453 = vmatprep.subr.bf16.mxu0 0
  %454 = vmatpush1.bf16.msra.mxu0 %v336
  %455 = vmatprep.subr.bf16.mxu0 0
  %456 = vmatpush1.bf16.msra.mxu0 %v337
  %457 = vmatprep.subr.bf16.mxu0 0
  %458 = vmatpush1.bf16.msra.mxu0 %v338
  %459 = vmatprep.subr.bf16.mxu0 0
  %460 = vmatpush1.bf16.msra.mxu0 %v339
  %461 = vmatprep.subr.bf16.mxu0 0
  %462 = vmatpush1.bf16.msra.mxu0 %v340
  %463 = vmatprep.subr.bf16.mxu0 0
  %464 = vmatpush1.bf16.msra.mxu0 %v341
  %465 = vmatprep.subr.bf16.mxu0 0
  %466 = vmatpush1.bf16.msra.mxu0 %v342
  %467 = vmatprep.subr.bf16.mxu0 0
  %468 = vmatpush1.bf16.msra.mxu0 %v343
  %469 = vmatprep.subr.bf16.mxu0 0
  %470 = vmatpush1.bf16.msra.mxu0 %v344
  %471 = vmatprep.subr.bf16.mxu0 0
  %472 = vmatpush1.bf16.msra.mxu0 %v345
  %473 = vmatprep.subr.bf16.mxu0 0
  %474 = vmatpush1.bf16.msra.mxu0 %v346
  %475 = vmatprep.subr.bf16.mxu0 0
  %476 = vmatpush1.bf16.msra.mxu0 %v347
  %477 = vmatprep.mubr.bf16.mxu0 %v139
  %478 = vmatmul.mubr.bf16.gmra.mrb[0].mxu0 %v138
  %v479 = vpop.f32.mrb[0].mxu0
  %v480 = vadd.f32 %v431, %v479
  %v481 = vpop.f32.mrb[0].mxu0
  %v482 = vpop.f32.mrb[0].mxu0
  %v483 = vadd.f32 %v434, %v482
  %v484 = vpop.f32.mrb[0].mxu0
  %485 = vmatprep.mubr.bf16.mxu0 %v144
  %486 = vmatmul.mubr.bf16.gmra.mrb[0].mxu0 %v143
  %v487 = vpop.f32.mrb[0].mxu0
  %v488 = vadd.f32 %v439, %v487
  %v489 = vpop.f32.mrb[0].mxu0
  %v490 = vpop.f32.mrb[0].mxu0
  %v491 = vadd.f32 %v442, %v490
  %v492 = vpop.f32.mrb[0].mxu0
  %493 = vdwg.mxu0
  %494 = vmatprep.subr.bf16.mxu0 0
  %495 = vmatpush1.bf16.msra.mxu0 %v348
  %496 = vmatprep.subr.bf16.mxu0 0
  %497 = vmatpush1.bf16.msra.mxu0 %v349
  %498 = vmatprep.subr.bf16.mxu0 0
  %499 = vmatpush1.bf16.msra.mxu0 %v350
  %500 = vmatprep.subr.bf16.mxu0 0
  %501 = vmatpush1.bf16.msra.mxu0 %v351
  %502 = vmatprep.subr.bf16.mxu0 0
  %503 = vmatpush1.bf16.msra.mxu0 %v352
  %504 = vmatprep.subr.bf16.mxu0 0
  %505 = vmatpush1.bf16.msra.mxu0 %v353
  %506 = vmatprep.subr.bf16.mxu0 0
  %507 = vmatpush1.bf16.msra.mxu0 %v354
  %508 = vmatprep.subr.bf16.mxu0 0
  %509 = vmatpush1.bf16.msra.mxu0 %v355
  %510 = vmatprep.subr.bf16.mxu0 0
  %511 = vmatpush1.bf16.msra.mxu0 0
  %512 = vmatprep.subr.bf16.mxu0 0
  %513 = vmatpush1.bf16.msra.mxu0 0
  %514 = vmatprep.subr.bf16.mxu0 0
  %515 = vmatpush1.bf16.msra.mxu0 0
  %516 = vmatprep.subr.bf16.mxu0 0
  %517 = vmatpush1.bf16.msra.mxu0 0
  %518 = vmatprep.subr.bf16.mxu0 0
  %519 = vmatpush1.bf16.msra.mxu0 0
  %520 = vmatprep.subr.bf16.mxu0 0
  %521 = vmatpush1.bf16.msra.mxu0 0
  %522 = vmatprep.subr.bf16.mxu0 0
  %523 = vmatpush1.bf16.msra.mxu0 0
  %524 = vmatprep.subr.bf16.mxu0 0
  %525 = vmatpush1.bf16.msra.mxu0 0
  %526 = vmatprep.mubr.bf16.mxu0 0
  %527 = vmatmul.mubr.bf16.gmra.mrb[0].mxu0 %v140
  %v528 = vpop.f32.mrb[0].mxu0
  %v529 = vadd.f32 %v480, %v528
  %v530 = vpop.f32.mrb[0].mxu0
  %v531 = vpop.f32.mrb[0].mxu0
  %v532 = vadd.f32 %v483, %v531
  %v533 = vpop.f32.mrb[0].mxu0
  %534 = vmatprep.mubr.bf16.mxu0 0
  %535 = vmatmul.mubr.bf16.gmra.mrb[0].mxu0 %v145
  %v536 = vpop.f32.mrb[0].mxu0
  %v537 = vadd.f32 %v488, %v536
  %v538 = vpop.f32.mrb[0].mxu0
  %v539 = vpop.f32.mrb[0].mxu0
  %v540 = vadd.f32 %v491, %v539
  %v541 = vpop.f32.mrb[0].mxu0
  %542 = vdwg.mxu0
  %v543 = vadd.f32 %v529, %v532
  %v544 = vadd.f32 %v543, %v537
  %v545 = vadd.f32 %v544, %v540
  %v546 = vrot.slane %v545, 4
  %v547 = vadd.f32 %v545, %v546
  %v548 = vrot.slane %v547, 2
  %v549 = vadd.f32 %v547, %v548
  %v550 = vrot.slane %v549, 1
  %v551 = vadd.f32 %v549, %v550
  %v552 = vmul.f32 %v529, %v529
  %v553 = vmul.f32 %v532, %v532
  %v554 = vmul.f32 %v537, %v537
  %v555 = vmul.f32 %v540, %v540
  %v556 = vadd.f32 %v552, %v553
  %v557 = vadd.f32 %v556, %v554
  %v558 = vadd.f32 %v557, %v555
  %v559 = vrot.slane %v558, 4
  %v560 = vadd.f32 %v558, %v559
  %v561 = vrot.slane %v560, 2
  %v562 = vadd.f32 %v560, %v561
  %v563 = vrot.slane %v562, 1
  %v564 = vadd.f32 %v562, %v563
  %565 = vrot.lane.b32.xlu0 %v551, 8
  %v566 = vpop.permute.xlu0 %565
  %v567 = vadd.f32 %v551, %v566
  %568 = vrot.lane.b32.xlu0 %v564, 8
  %v569 = vpop.permute.xlu0 %568
  %v570 = vadd.f32 %v564, %v569
  %571 = vrot.lane.b32.xlu0 %v567, 16
  %v572 = vpop.permute.xlu0 %571
  %v573 = vadd.f32 %v567, %v572
  %574 = vrot.lane.b32.xlu0 %v570, 16
  %v575 = vpop.permute.xlu0 %574
  %v576 = vadd.f32 %v570, %v575
  %577 = vrot.lane.b32.xlu0 %v573, 32
  %v578 = vpop.permute.xlu0 %577
  %v579 = vadd.f32 %v573, %v578
  %580 = vrot.lane.b32.xlu0 %v576, 32
  %v581 = vpop.permute.xlu0 %580
  %v582 = vadd.f32 %v576, %v581
  %583 = vrot.lane.b32.xlu0 %v579, 64
  %v584 = vpop.permute.xlu0 %583
  %v585 = vadd.f32 %v579, %v584
  %586 = vrot.lane.b32.xlu0 %v582, 64
  %v587 = vpop.permute.xlu0 %586
  %v588 = vadd.f32 %v582, %v587
  %v589 = vmul.f32 %v585, 0.001953125
  %v590 = vmul.f32 %v588, 0.001953125
  %v591 = vmul.f32 %v589, %v589
  %v592 = vsub.f32 %v590, %v591
  %v593 = vadd.f32 %v592, 1e-05
  %v594 = vrsqrt.pop %v593
  %v595 = vlaneseq
  %v596 = vshrl.u32 %v595, 7
  %v597 = vsub.s32 0, %v596
  %v598 = vrot.slane %v589, %v597
  %v599 = vsub.f32 %v529, %v598
  %v600 = vsub.f32 %v532, %v598
  %v601 = vsub.f32 %v537, %v598
  %v602 = vsub.f32 %v540, %v598
  %v603 = vlaneseq
  %v604 = vshrl.u32 %v603, 7
  %v605 = vsub.s32 0, %v604
  %v606 = vrot.slane %v594, %v605
  %v607 = vmul.f32 %v599, %v606
  %v608 = vmul.f32 %v600, %v606
  %v609 = vmul.f32 %v601, %v606
  %v610 = vmul.f32 %v602, %v606
  %vm611 = vcmp.ge.f32.partialorder %v607, 0.0
  %vm612 = vcmp.ge.f32.partialorder %v608, 0.0
  %vm613 = vcmp.ge.f32.partialorder %v609, 0.0
  %vm614 = vcmp.ge.f32.partialorder %v610, 0.0
  %v615 = vmul.f32 %v607, 0.01
  %v616 = vmul.f32 %v608, 0.01
  %v617 = vmul.f32 %v609, 0.01
  %v618 = vmul.f32 %v610, 0.01
  %v619 = vsel %vm611, %v607, %v615
  %v620 = vsel %vm612, %v608, %v616
  %v621 = vsel %vm613, %v609, %v617
  %v622 = vsel %vm614, %v610, %v618
  %v623 = vpack.c.bf16 %v620, %v619
  %v624 = vpack.c.bf16 %v622, %v621
  %v627 = vunpack.c.l.b16 %v623
  %v628 = vunpack.c.h.b16 %v623
  %v629 = vunpack.c.l.b16 %v624
  %v630 = vunpack.c.h.b16 %v624
  %v631 = vpack.c.b16 %v627, %v627
  %v632 = vpack.c.b16 %v628, %v628
  %v633 = vpack.c.b16 %v629, %v629
  %v634 = vpack.c.b16 %v630, %v630
  %639 = vst [vmem:[%s2] sm:$0xf] %v631
  %640 = vst [vmem:[%s2 + $0x4] sm:$0xf] %v632
  %641 = vst [vmem:[%s2 + $0x8] sm:$0xf] %v633
  %642 = vst [vmem:[%s2 + $0xc] sm:$0xf] %v634
  // Predicated region
  $region10: #{discrim_block_forward.2} parent=0 // pred_check
    _
  $region11: #{discrim_block_forward.2} parent=0 // pred_check_branch
    %644 = sbr.rel (0) target = $region13
  $region12: #{discrim_block_forward.2} parent=0 // pred_region
    _
  $region13: #{discrim_block_forward.2} parent=0 // pred_fallthru
    _
  // Predicated region
  $region14: #{discrim_block_forward.2} parent=0 // pred_check
    _
  $region15: #{discrim_block_forward.2} parent=0 // pred_check_branch
    %646 = sbr.rel (0) target = $region17
  $region16: #{discrim_block_forward.2} parent=0 // pred_region
    _
  $region17: #{discrim_block_forward.2} parent=0 // pred_fallthru
    _

// kernel: mul.18
$region0: #{mul.18}
  %s0 = inlined_call_operand.vmem [shape: f32[3,3,8,8], index: 0, kind: input, shape index: {}]
  %s1 = inlined_call_operand.vmem [shape: f32[72,8], index: 1, kind: output, shape index: {}]
  $region1: #{mul.18} parent=0
    #allocation0 [shape = 'u8[98304]{0}', space=vmem, size = 0x18000, scoped, tag = 'scoped mem for input reshape']
    %s3 = sshllo.u32 0, 4
    %s4 = smul.addr 4, 23
    %s5 = scalar_lea.vmem %s0, %s4
    %v6 = vld [vmem:[%s5] sm:%s3]
    %s7 = scalar_lea.vmem [#allocation0], 184
    %8 = vst [vmem:[%s7] sm:%s3] %v6
    %s9 = smul.addr 4, 22
    %s10 = scalar_lea.vmem %s0, %s9
    %v11 = vld [vmem:[%s10] sm:%s3]
    %s12 = scalar_lea.vmem [#allocation0], 176
    %13 = vst [vmem:[%s12] sm:%s3] %v11
    %s14 = smul.addr 4, 21
    %s15 = scalar_lea.vmem %s0, %s14
    %v16 = vld [vmem:[%s15] sm:%s3]
    %s17 = scalar_lea.vmem [#allocation0], 168
    %18 = vst [vmem:[%s17] sm:%s3] %v16
    %s19 = smul.addr 4, 20
    %s20 = scalar_lea.vmem %s0, %s19
    %v21 = vld [vmem:[%s20] sm:%s3]
    %s22 = scalar_lea.vmem [#allocation0], 160
    %23 = vst [vmem:[%s22] sm:%s3] %v21
    %s24 = smul.addr 4, 19
    %s25 = scalar_lea.vmem %s0, %s24
    %v26 = vld [vmem:[%s25] sm:%s3]
    %s27 = scalar_lea.vmem [#allocation0], 152
    %28 = vst [vmem:[%s27] sm:%s3] %v26
    %s29 = smul.addr 4, 18
    %s30 = scalar_lea.vmem %s0, %s29
    %v31 = vld [vmem:[%s30] sm:%s3]
    %s32 = scalar_lea.vmem [#allocation0], 144
    %33 = vst [vmem:[%s32] sm:%s3] %v31
    %s34 = smul.addr 4, 17
    %s35 = scalar_lea.vmem %s0, %s34
    %v36 = vld [vmem:[%s35] sm:%s3]
    %s37 = scalar_lea.vmem [#allocation0], 136
    %38 = vst [vmem:[%s37] sm:%s3] %v36
    %s39 = smul.addr 4, 16
    %s40 = scalar_lea.vmem %s0, %s39
    %v41 = vld [vmem:[%s40] sm:%s3]
    %s42 = scalar_lea.vmem [#allocation0], 128
    %43 = vst [vmem:[%s42] sm:%s3] %v41
    %s44 = smul.addr 4, 15
    %s45 = scalar_lea.vmem %s0, %s44
    %v46 = vld [vmem:[%s45] sm:%s3]
    %s47 = scalar_lea.vmem [#allocation0], 120
    %48 = vst [vmem:[%s47] sm:%s3] %v46
    %s49 = smul.addr 4, 14
    %s50 = scalar_lea.vmem %s0, %s49
    %v51 = vld [vmem:[%s50] sm:%s3]
    %s52 = scalar_lea.vmem [#allocation0], 112
    %53 = vst [vmem:[%s52] sm:%s3] %v51
    %s54 = smul.addr 4, 13
    %s55 = scalar_lea.vmem %s0, %s54
    %v56 = vld [vmem:[%s55] sm:%s3]
    %s57 = scalar_lea.vmem [#allocation0], 104
    %58 = vst [vmem:[%s57] sm:%s3] %v56
    %s59 = smul.addr 4, 12
    %s60 = scalar_lea.vmem %s0, %s59
    %v61 = vld [vmem:[%s60] sm:%s3]
    %s62 = scalar_lea.vmem [#allocation0], 96
    %63 = vst [vmem:[%s62] sm:%s3] %v61
    %s64 = smul.addr 4, 11
    %s65 = scalar_lea.vmem %s0, %s64
    %v66 = vld [vmem:[%s65] sm:%s3]
    %s67 = scalar_lea.vmem [#allocation0], 88
    %68 = vst [vmem:[%s67] sm:%s3] %v66
    %s69 = smul.addr 4, 10
    %s70 = scalar_lea.vmem %s0, %s69
    %v71 = vld [vmem:[%s70] sm:%s3]
    %s72 = scalar_lea.vmem [#allocation0], 80
    %73 = vst [vmem:[%s72] sm:%s3] %v71
    %s74 = smul.addr 4, 9
    %s75 = scalar_lea.vmem %s0, %s74
    %v76 = vld [vmem:[%s75] sm:%s3]
    %s77 = scalar_lea.vmem [#allocation0], 72
    %78 = vst [vmem:[%s77] sm:%s3] %v76
    %s79 = smul.addr 4, 8
    %s80 = scalar_lea.vmem %s0, %s79
    %v81 = vld [vmem:[%s80] sm:%s3]
    %s82 = scalar_lea.vmem [#allocation0], 64
    %83 = vst [vmem:[%s82] sm:%s3] %v81
    %s84 = smul.addr 4, 7
    %s85 = scalar_lea.vmem %s0, %s84
    %v86 = vld [vmem:[%s85] sm:%s3]
    %s87 = scalar_lea.vmem [#allocation0], 56
    %88 = vst [vmem:[%s87] sm:%s3] %v86
    %s89 = smul.addr 4, 6
    %s90 = scalar_lea.vmem %s0, %s89
    %v91 = vld [vmem:[%s90] sm:%s3]
    %s92 = scalar_lea.vmem [#allocation0], 48
    %93 = vst [vmem:[%s92] sm:%s3] %v91
    %s94 = smul.addr 4, 5
    %s95 = scalar_lea.vmem %s0, %s94
    %v96 = vld [vmem:[%s95] sm:%s3]
    %s97 = scalar_lea.vmem [#allocation0], 40
    %98 = vst [vmem:[%s97] sm:%s3] %v96
    %s99 = smul.addr 4, 4
    %s100 = scalar_lea.vmem %s0, %s99
    %v101 = vld [vmem:[%s100] sm:%s3]
    %s102 = scalar_lea.vmem [#allocation0], 32
    %103 = vst [vmem:[%s102] sm:%s3] %v101
    %s104 = smul.addr 4, 3
    %s105 = scalar_lea.vmem %s0, %s104
    %v106 = vld [vmem:[%s105] sm:%s3]
    %s107 = scalar_lea.vmem [#allocation0], 24
    %108 = vst [vmem:[%s107] sm:%s3] %v106
    %s109 = smul.addr 4, 2
    %s110 = scalar_lea.vmem %s0, %s109
    %v111 = vld [vmem:[%s110] sm:%s3]
    %s112 = scalar_lea.vmem [#allocation0], 16
    %113 = vst [vmem:[%s112] sm:%s3] %v111
    %s114 = scalar_lea.vmem %s0, 4
    %v115 = vld [vmem:[%s114] sm:%s3]
    %s116 = scalar_lea.vmem [#allocation0], 8
    %117 = vst [vmem:[%s116] sm:%s3] %v115
    %v118 = vld [vmem:[%s0] sm:%s3]
    %119 = vst [vmem:[#allocation0] sm:%s3] %v118
    %v120 = vld [vmem:[#allocation0] ss:$24 sm:$0xf]
    %v121 = vld [vmem:[#allocation0] ss:$24 sm:$0xf0]
    %vm122 = vcmask 1047556
    %v123 = vsel %vm122, %v121, %v120
    %vm124 = vcmask 64512
    %125 = vst.msk [vmem:[%s1] sm:$0xff] %vm124, %v123
    %s126 = scalar_lea.vmem [#allocation0], 18
    %v127 = vld [vmem:[%s126] ss:$24 sm:$0xf]
    %s128 = scalar_lea.vmem [#allocation0], 18
    %v129 = vld [vmem:[%s128] ss:$24 sm:$0xf0]
    %vm130 = vcmask 1047556
    %v131 = vsel %vm130, %v129, %v127
    %132 = vrot.lane.b32.xlu0 %v131, 64
    %v133 = vpop.permute.xlu0 %132
    %vm134 = vcmask 589312
    %135 = vst.msk [vmem:[%s1] sm:$0xff] %vm134, %v133
    %s136 = scalar_lea.vmem [#allocation0], 17
    %v137 = vld [vmem:[%s136] ss:$24 sm:$0xf]
    %s138 = scalar_lea.vmem [#allocation0], 17
    %v139 = vld [vmem:[%s138] ss:$24 sm:$0xf0]
    %vm140 = vcmask 1047556
    %v141 = vsel %vm140, %v139, %v137
    %142 = vrot.lane.b32.xlu0 %v141, 56
    %v143 = vpop.permute.xlu0 %142
    %vm144 = vcmask 523712
    %145 = vst.msk [vmem:[%s1] sm:$0xff] %vm144, %v143
    %s146 = scalar_lea.vmem [#allocation0], 16
    %v147 = vld [vmem:[%s146] ss:$24 sm:$0xf]
    %s148 = scalar_lea.vmem [#allocation0], 16
    %v149 = vld [vmem:[%s148] ss:$24 sm:$0xf0]
    %vm150 = vcmask 1047556
    %v151 = vsel %vm150, %v149, %v147
    %152 = vrot.lane.b32.xlu0 %v151, 48
    %v153 = vpop.permute.xlu0 %152
    %vm154 = vcmask 458112
    %155 = vst.msk [vmem:[%s1] sm:$0xff] %vm154, %v153
    %s156 = scalar_lea.vmem [#allocation0], 10
    %v157 = vld [vmem:[%s156] ss:$24 sm:$0xf]
    %s158 = scalar_lea.vmem [#allocation0], 10
    %v159 = vld [vmem:[%s158] ss:$24 sm:$0xf0]
    %vm160 = vcmask 1047556
    %v161 = vsel %vm160, %v159, %v157
    %162 = vrot.lane.b32.xlu0 %v161, 40
    %v163 = vpop.permute.xlu0 %162
    %vm164 = vcmask 392512
    %165 = vst.msk [vmem:[%s1] sm:$0xff] %vm164, %v163
    %s166 = scalar_lea.vmem [#allocation0], 9
    %v167 = vld [vmem:[%s166] ss:$24 sm:$0xf]
    %s168 = scalar_lea.vmem [#allocation0], 9
    %v169 = vld [vmem:[%s168] ss:$24 sm:$0xf0]
    %vm170 = vcmask 1047556
    %v171 = vsel %vm170, %v169, %v167
    %172 = vrot.lane.b32.xlu0 %v171, 32
    %v173 = vpop.permute.xlu0 %172
    %vm174 = vcmask 326912
    %175 = vst.msk [vmem:[%s1] sm:$0xff] %vm174, %v173
    %s176 = scalar_lea.vmem [#allocation0], 8
    %v177 = vld [vmem:[%s176] ss:$24 sm:$0xf]
    %s178 = scalar_lea.vmem [#allocation0], 8
    %v179 = vld [vmem:[%s178] ss:$24 sm:$0xf0]
    %vm180 = vcmask 1047556
    %v181 = vsel %vm180, %v179, %v177
    %182 = vrot.lane.b32.xlu0 %v181, 24
    %v183 = vpop.permute.xlu0 %182
    %vm184 = vcmask 261312
    %185 = vst.msk [vmem:[%s1] sm:$0xff] %vm184, %v183
    %s186 = scalar_lea.vmem [#allocation0], 2
    %v187 = vld [vmem:[%s186] ss:$24 sm:$0xf]
    %s188 = scalar_lea.vmem [#allocation0], 2
    %v189 = vld [vmem:[%s188] ss:$24 sm:$0xf0]
    %vm190 = vcmask 1047556
    %v191 = vsel %vm190, %v189, %v187
    %192 = vrot.lane.b32.xlu0 %v191, 16
    %v193 = vpop.permute.xlu0 %192
    %vm194 = vcmask 195712
    %195 = vst.msk [vmem:[%s1] sm:$0xff] %vm194, %v193
    %s196 = scalar_lea.vmem [#allocation0], 1
    %v197 = vld [vmem:[%s196] ss:$24 sm:$0xf]
    %s198 = scalar_lea.vmem [#allocation0], 1
    %v199 = vld [vmem:[%s198] ss:$24 sm:$0xf0]
    %vm200 = vcmask 1047556
    %v201 = vsel %vm200, %v199, %v197
    %202 = vrot.lane.b32.xlu0 %v201, 8
    %v203 = vpop.permute.xlu0 %202
    %vm204 = vcmask 130112
    %205 = vst.msk [vmem:[%s1] sm:$0xff] %vm204, %v203

// kernel: discrim_block_forward.3
$region0: #{discrim_block_forward.3}
  #allocation0 [shape = 'u32[]', space=smem, size = 0x4, offset = 0x4, fixed_abs, tag = 'smem constant byte address 0x4 - core index']
  #allocation1 [shape = 'u32[144,128]{1,0:T(1,128)}', space=vmem, size = 0x12000, scoped, tag = 'internal scratch']
  %s0 = inlined_call_operand.vmem [shape: bf16[16,1152], index: 0, kind: input, shape index: {}]
  %s1 = inlined_call_operand.vmem [shape: bf16[1152,128], index: 1, kind: input, shape index: {}]
  %s2 = inlined_call_operand.vmem [shape: bf16[16,128], index: 2, kind: output, shape index: {}]
  %s3 = sld [smem:[#allocation0]]
  $region18: #{discrim_block_forward.3} parent=0
    _
  %s5 = ssub.s32 1, %s3
  %s6 = scalar_select 0, %s5, %s3
  // Predicated region
  $region2: #{discrim_block_forward.3} parent=0 // pred_check
    _
  $region3: #{discrim_block_forward.3} parent=0 // pred_check_branch
    %8 = sbr.rel (0) target = $region5
  $region4: #{discrim_block_forward.3} parent=0 // pred_region
    _
  $region5: #{discrim_block_forward.3} parent=0 // pred_fallthru
    _
  // Predicated region
  $region6: #{discrim_block_forward.3} parent=0 // pred_check
    _
  $region7: #{discrim_block_forward.3} parent=0 // pred_check_branch
    %10 = sbr.rel (0) target = $region9
  $region8: #{discrim_block_forward.3} parent=0 // pred_region
    _
  $region9: #{discrim_block_forward.3} parent=0 // pred_fallthru
    _
  %v12 = vld [vmem:[%s0] sm:$0xff]
  %v13 = vld [vmem:[%s0 + $0x8] sm:$0xff]
  %v14 = vld [vmem:[%s0 + $0x10] sm:$0xff]
  %v15 = vld [vmem:[%s0 + $0x18] sm:$0xff]
  %v16 = vld [vmem:[%s0 + $0x20] sm:$0xf]
  %v17 = vld [vmem:[%s0 + $0x24] sm:$0xff]
  %v18 = vld [vmem:[%s0 + $0x2c] sm:$0xff]
  %v19 = vld [vmem:[%s0 + $0x34] sm:$0xff]
  %v20 = vld [vmem:[%s0 + $0x3c] sm:$0xff]
  %v21 = vld [vmem:[%s0 + $0x44] sm:$0xf]
  %v22 = vld [vmem:[%s1] sm:$0xf]
  %v23 = vld [vmem:[%s1 + $0x4] sm:$0xf]
  %v24 = vld [vmem:[%s1 + $0x8] sm:$0xf]
  %v25 = vld [vmem:[%s1 + $0xc] sm:$0xf]
  %v26 = vld [vmem:[%s1 + $0x10] sm:$0xf]
  %v27 = vld [vmem:[%s1 + $0x14] sm:$0xf]
  %v28 = vld [vmem:[%s1 + $0x18] sm:$0xf]
  %v29 = vld [vmem:[%s1 + $0x1c] sm:$0xf]
  %v30 = vld [vmem:[%s1 + $0x20] sm:$0xf]
  %v31 = vld [vmem:[%s1 + $0x24] sm:$0xf]
  %v32 = vld [vmem:[%s1 + $0x28] sm:$0xf]
  %v33 = vld [vmem:[%s1 + $0x2c] sm:$0xf]
  %v34 = vld [vmem:[%s1 + $0x30] sm:$0xf]
  %v35 = vld [vmem:[%s1 + $0x34] sm:$0xf]
  %v36 = vld [vmem:[%s1 + $0x38] sm:$0xf]
  %v37 = vld [vmem:[%s1 + $0x3c] sm:$0xf]
  %v38 = vld [vmem:[%s1 + $0x40] sm:$0xf]
  %v39 = vld [vmem:[%s1 + $0x44] sm:$0xf]
  %v40 = vld [vmem:[%s1 + $0x48] sm:$0xf]
  %v41 = vld [vmem:[%s1 + $0x4c] sm:$0xf]
  %v42 = vld [vmem:[%s1 + $0x50] sm:$0xf]
  %v43 = vld [vmem:[%s1 + $0x54] sm:$0xf]
  %v44 = vld [vmem:[%s1 + $0x58] sm:$0xf]
  %v45 = vld [vmem:[%s1 + $0x5c] sm:$0xf]
  %v46 = vld [vmem:[%s1 + $0x60] sm:$0xf]
  %v47 = vld [vmem:[%s1 + $0x64] sm:$0xf]
  %v48 = vld [vmem:[%s1 + $0x68] sm:$0xf]
  %v49 = vld [vmem:[%s1 + $0x6c] sm:$0xf]
  %v50 = vld [vmem:[%s1 + $0x70] sm:$0xf]
  %v51 = vld [vmem:[%s1 + $0x74] sm:$0xf]
  %v52 = vld [vmem:[%s1 + $0x78] sm:$0xf]
  %v53 = vld [vmem:[%s1 + $0x7c] sm:$0xf]
  %v54 = vld [vmem:[%s1 + $0x80] sm:$0xf]
  %v55 = vld [vmem:[%s1 + $0x84] sm:$0xf]
  %v56 = vld [vmem:[%s1 + $0x88] sm:$0xf]
  %v57 = vld [vmem:[%s1 + $0x8c] sm:$0xf]
  %v58 = vld [vmem:[%s1 + $0x90] sm:$0xf]
  %v59 = vld [vmem:[%s1 + $0x94] sm:$0xf]
  %v60 = vld [vmem:[%s1 + $0x98] sm:$0xf]
  %v61 = vld [vmem:[%s1 + $0x9c] sm:$0xf]
  %v62 = vld [vmem:[%s1 + $0xa0] sm:$0xf]
  %v63 = vld [vmem:[%s1 + $0xa4] sm:$0xf]
  %v64 = vld [vmem:[%s1 + $0xa8] sm:$0xf]
  %v65 = vld [vmem:[%s1 + $0xac] sm:$0xf]
  %v66 = vld [vmem:[%s1 + $0xb0] sm:$0xf]
  %v67 = vld [vmem:[%s1 + $0xb4] sm:$0xf]
  %v68 = vld [vmem:[%s1 + $0xb8] sm:$0xf]
  %v69 = vld [vmem:[%s1 + $0xbc] sm:$0xf]
  %v70 = vld [vmem:[%s1 + $0xc0] sm:$0xf]
  %v71 = vld [vmem:[%s1 + $0xc4] sm:$0xf]
  %v72 = vld [vmem:[%s1 + $0xc8] sm:$0xf]
  %v73 = vld [vmem:[%s1 + $0xcc] sm:$0xf]
  %v74 = vld [vmem:[%s1 + $0xd0] sm:$0xf]
  %v75 = vld [vmem:[%s1 + $0xd4] sm:$0xf]
  %v76 = vld [vmem:[%s1 + $0xd8] sm:$0xf]
  %v77 = vld [vmem:[%s1 + $0xdc] sm:$0xf]
  %v78 = vld [vmem:[%s1 + $0xe0] sm:$0xf]
  %v79 = vld [vmem:[%s1 + $0xe4] sm:$0xf]
  %v80 = vld [vmem:[%s1 + $0xe8] sm:$0xf]
  %v81 = vld [vmem:[%s1 + $0xec] sm:$0xf]
  %v82 = vld [vmem:[%s1 + $0xf0] sm:$0xf]
  %v83 = vld [vmem:[%s1 + $0xf4] sm:$0xf]
  %v84 = vld [vmem:[%s1 + $0xf8] sm:$0xf]
  %v85 = vld [vmem:[%s1 + $0xfc] sm:$0xf]
  %v86 = vld [vmem:[%s1 + $0x100] sm:$0xf]
  %v87 = vld [vmem:[%s1 + $0x104] sm:$0xf]
  %v88 = vld [vmem:[%s1 + $0x108] sm:$0xf]
  %v89 = vld [vmem:[%s1 + $0x10c] sm:$0xf]
  %v90 = vld [vmem:[%s1 + $0x110] sm:$0xf]
  %v91 = vld [vmem:[%s1 + $0x114] sm:$0xf]
  %v92 = vld [vmem:[%s1 + $0x118] sm:$0xf]
  %v93 = vld [vmem:[%s1 + $0x11c] sm:$0xf]
  %v94 = vld [vmem:[%s1 + $0x120] sm:$0xf]
  %v95 = vld [vmem:[%s1 + $0x124] sm:$0xf]
  %v96 = vld [vmem:[%s1 + $0x128] sm:$0xf]
  %v97 = vld [vmem:[%s1 + $0x12c] sm:$0xf]
  %v98 = vld [vmem:[%s1 + $0x130] sm:$0xf]
  %v99 = vld [vmem:[%s1 + $0x134] sm:$0xf]
  %v100 = vld [vmem:[%s1 + $0x138] sm:$0xf]
  %v101 = vld [vmem:[%s1 + $0x13c] sm:$0xf]
  %v102 = vld [vmem:[%s1 + $0x140] sm:$0xf]
  %v103 = vld [vmem:[%s1 + $0x144] sm:$0xf]
  %v104 = vld [vmem:[%s1 + $0x148] sm:$0xf]
  %v105 = vld [vmem:[%s1 + $0x14c] sm:$0xf]
  %v106 = vld [vmem:[%s1 + $0x150] sm:$0xf]
  %v107 = vld [vmem:[%s1 + $0x154] sm:$0xf]
  %v108 = vld [vmem:[%s1 + $0x158] sm:$0xf]
  %v109 = vld [vmem:[%s1 + $0x15c] sm:$0xf]
  %v110 = vld [vmem:[%s1 + $0x160] sm:$0xf]
  %v111 = vld [vmem:[%s1 + $0x164] sm:$0xf]
  %v112 = vld [vmem:[%s1 + $0x168] sm:$0xf]
  %v113 = vld [vmem:[%s1 + $0x16c] sm:$0xf]
  %v114 = vld [vmem:[%s1 + $0x170] sm:$0xf]
  %v115 = vld [vmem:[%s1 + $0x174] sm:$0xf]
  %v116 = vld [vmem:[%s1 + $0x178] sm:$0xf]
  %v117 = vld [vmem:[%s1 + $0x17c] sm:$0xf]
  %v118 = vld [vmem:[%s1 + $0x180] sm:$0xf]
  %v119 = vld [vmem:[%s1 + $0x184] sm:$0xf]
  %v120 = vld [vmem:[%s1 + $0x188] sm:$0xf]
  %v121 = vld [vmem:[%s1 + $0x18c] sm:$0xf]
  %v122 = vld [vmem:[%s1 + $0x190] sm:$0xf]
  %v123 = vld [vmem:[%s1 + $0x194] sm:$0xf]
  %v124 = vld [vmem:[%s1 + $0x198] sm:$0xf]
  %v125 = vld [vmem:[%s1 + $0x19c] sm:$0xf]
  %v126 = vld [vmem:[%s1 + $0x1a0] sm:$0xf]
  %v127 = vld [vmem:[%s1 + $0x1a4] sm:$0xf]
  %v128 = vld [vmem:[%s1 + $0x1a8] sm:$0xf]
  %v129 = vld [vmem:[%s1 + $0x1ac] sm:$0xf]
  %v130 = vld [vmem:[%s1 + $0x1b0] sm:$0xf]
  %v131 = vld [vmem:[%s1 + $0x1b4] sm:$0xf]
  %v132 = vld [vmem:[%s1 + $0x1b8] sm:$0xf]
  %v133 = vld [vmem:[%s1 + $0x1bc] sm:$0xf]
  %v134 = vld [vmem:[%s1 + $0x1c0] sm:$0xf]
  %v135 = vld [vmem:[%s1 + $0x1c4] sm:$0xf]
  %v136 = vld [vmem:[%s1 + $0x1c8] sm:$0xf]
  %v137 = vld [vmem:[%s1 + $0x1cc] sm:$0xf]
  %v138 = vld [vmem:[%s1 + $0x1d0] sm:$0xf]
  %v139 = vld [vmem:[%s1 + $0x1d4] sm:$0xf]
  %v140 = vld [vmem:[%s1 + $0x1d8] sm:$0xf]
  %v141 = vld [vmem:[%s1 + $0x1dc] sm:$0xf]
  %v142 = vld [vmem:[%s1 + $0x1e0] sm:$0xf]
  %v143 = vld [vmem:[%s1 + $0x1e4] sm:$0xf]
  %v144 = vld [vmem:[%s1 + $0x1e8] sm:$0xf]
  %v145 = vld [vmem:[%s1 + $0x1ec] sm:$0xf]
  %v146 = vld [vmem:[%s1 + $0x1f0] sm:$0xf]
  %v147 = vld [vmem:[%s1 + $0x1f4] sm:$0xf]
  %v148 = vld [vmem:[%s1 + $0x1f8] sm:$0xf]
  %v149 = vld [vmem:[%s1 + $0x1fc] sm:$0xf]
  %v150 = vld [vmem:[%s1 + $0x200] sm:$0xf]
  %v151 = vld [vmem:[%s1 + $0x204] sm:$0xf]
  %v152 = vld [vmem:[%s1 + $0x208] sm:$0xf]
  %v153 = vld [vmem:[%s1 + $0x20c] sm:$0xf]
  %v154 = vld [vmem:[%s1 + $0x210] sm:$0xf]
  %v155 = vld [vmem:[%s1 + $0x214] sm:$0xf]
  %v156 = vld [vmem:[%s1 + $0x218] sm:$0xf]
  %v157 = vld [vmem:[%s1 + $0x21c] sm:$0xf]
  %v158 = vld [vmem:[%s1 + $0x220] sm:$0xf]
  %v159 = vld [vmem:[%s1 + $0x224] sm:$0xf]
  %v160 = vld [vmem:[%s1 + $0x228] sm:$0xf]
  %v161 = vld [vmem:[%s1 + $0x22c] sm:$0xf]
  %v162 = vld [vmem:[%s1 + $0x230] sm:$0xf]
  %v163 = vld [vmem:[%s1 + $0x234] sm:$0xf]
  %v164 = vld [vmem:[%s1 + $0x238] sm:$0xf]
  %v165 = vld [vmem:[%s1 + $0x23c] sm:$0xf]
  %v176 = vunpack.c.l.b16 %v12
  %v177 = vunpack.c.h.b16 %v12
  %v178 = vunpack.c.l.b16 %v13
  %v179 = vunpack.c.h.b16 %v13
  %v180 = vunpack.c.l.b16 %v14
  %v181 = vunpack.c.h.b16 %v14
  %v182 = vunpack.c.l.b16 %v15
  %v183 = vunpack.c.h.b16 %v15
  %v184 = vunpack.c.l.b16 %v16
  %v185 = vunpack.c.l.b16 %v17
  %v186 = vunpack.c.h.b16 %v17
  %v187 = vunpack.c.l.b16 %v18
  %v188 = vunpack.c.h.b16 %v18
  %v189 = vunpack.c.l.b16 %v19
  %v190 = vunpack.c.h.b16 %v19
  %v191 = vunpack.c.l.b16 %v20
  %v192 = vunpack.c.h.b16 %v20
  %v193 = vunpack.c.l.b16 %v21
  %v194 = vpack.c.b16 %v185, %v176
  %v195 = vpack.c.b16 %v186, %v177
  %v196 = vpack.c.b16 %v187, %v178
  %v197 = vpack.c.b16 %v188, %v179
  %v198 = vpack.c.b16 %v189, %v180
  %v199 = vpack.c.b16 %v190, %v181
  %v200 = vpack.c.b16 %v191, %v182
  %v201 = vpack.c.b16 %v192, %v183
  %v202 = vpack.c.b16 %v193, %v184
  %v356 = vunpack.c.l.b16 %v22
  %v357 = vunpack.c.l.b16 %v23
  %v358 = vunpack.c.l.b16 %v24
  %v359 = vunpack.c.l.b16 %v25
  %v360 = vunpack.c.l.b16 %v26
  %v361 = vunpack.c.l.b16 %v27
  %v362 = vunpack.c.l.b16 %v28
  %v363 = vunpack.c.l.b16 %v29
  %v364 = vunpack.c.l.b16 %v30
  %v365 = vunpack.c.l.b16 %v31
  %v366 = vunpack.c.l.b16 %v32
  %v367 = vunpack.c.l.b16 %v33
  %v368 = vunpack.c.l.b16 %v34
  %v369 = vunpack.c.l.b16 %v35
  %v370 = vunpack.c.l.b16 %v36
  %v371 = vunpack.c.l.b16 %v37
  %v372 = vunpack.c.l.b16 %v38
  %v373 = vunpack.c.l.b16 %v39
  %v374 = vunpack.c.l.b16 %v40
  %v375 = vunpack.c.l.b16 %v41
  %v376 = vunpack.c.l.b16 %v42
  %v377 = vunpack.c.l.b16 %v43
  %v378 = vunpack.c.l.b16 %v44
  %v379 = vunpack.c.l.b16 %v45
  %v380 = vunpack.c.l.b16 %v46
  %v381 = vunpack.c.l.b16 %v47
  %v382 = vunpack.c.l.b16 %v48
  %v383 = vunpack.c.l.b16 %v49
  %v384 = vunpack.c.l.b16 %v50
  %v385 = vunpack.c.l.b16 %v51
  %v386 = vunpack.c.l.b16 %v52
  %v387 = vunpack.c.l.b16 %v53
  %v388 = vunpack.c.l.b16 %v54
  %v389 = vunpack.c.l.b16 %v55
  %v390 = vunpack.c.l.b16 %v56
  %v391 = vunpack.c.l.b16 %v57
  %v392 = vunpack.c.l.b16 %v58
  %v393 = vunpack.c.l.b16 %v59
  %v394 = vunpack.c.l.b16 %v60
  %v395 = vunpack.c.l.b16 %v61
  %v396 = vunpack.c.l.b16 %v62
  %v397 = vunpack.c.l.b16 %v63
  %v398 = vunpack.c.l.b16 %v64
  %v399 = vunpack.c.l.b16 %v65
  %v400 = vunpack.c.l.b16 %v66
  %v401 = vunpack.c.l.b16 %v67
  %v402 = vunpack.c.l.b16 %v68
  %v403 = vunpack.c.l.b16 %v69
  %v404 = vunpack.c.l.b16 %v70
  %v405 = vunpack.c.l.b16 %v71
  %v406 = vunpack.c.l.b16 %v72
  %v407 = vunpack.c.l.b16 %v73
  %v408 = vunpack.c.l.b16 %v74
  %v409 = vunpack.c.l.b16 %v75
  %v410 = vunpack.c.l.b16 %v76
  %v411 = vunpack.c.l.b16 %v77
  %v412 = vunpack.c.l.b16 %v78
  %v413 = vunpack.c.l.b16 %v79
  %v414 = vunpack.c.l.b16 %v80
  %v415 = vunpack.c.l.b16 %v81
  %v416 = vunpack.c.l.b16 %v82
  %v417 = vunpack.c.l.b16 %v83
  %v418 = vunpack.c.l.b16 %v84
  %v419 = vunpack.c.l.b16 %v85
  %v420 = vunpack.c.l.b16 %v86
  %v421 = vunpack.c.l.b16 %v87
  %v422 = vunpack.c.l.b16 %v88
  %v423 = vunpack.c.l.b16 %v89
  %v424 = vunpack.c.l.b16 %v90
  %v425 = vunpack.c.l.b16 %v91
  %v426 = vunpack.c.l.b16 %v92
  %v427 = vunpack.c.l.b16 %v93
  %v428 = vunpack.c.l.b16 %v94
  %v429 = vunpack.c.l.b16 %v95
  %v430 = vunpack.c.l.b16 %v96
  %v431 = vunpack.c.l.b16 %v97
  %v432 = vunpack.c.l.b16 %v98
  %v433 = vunpack.c.l.b16 %v99
  %v434 = vunpack.c.l.b16 %v100
  %v435 = vunpack.c.l.b16 %v101
  %v436 = vunpack.c.l.b16 %v102
  %v437 = vunpack.c.l.b16 %v103
  %v438 = vunpack.c.l.b16 %v104
  %v439 = vunpack.c.l.b16 %v105
  %v440 = vunpack.c.l.b16 %v106
  %v441 = vunpack.c.l.b16 %v107
  %v442 = vunpack.c.l.b16 %v108
  %v443 = vunpack.c.l.b16 %v109
  %v444 = vunpack.c.l.b16 %v110
  %v445 = vunpack.c.l.b16 %v111
  %v446 = vunpack.c.l.b16 %v112
  %v447 = vunpack.c.l.b16 %v113
  %v448 = vunpack.c.l.b16 %v114
  %v449 = vunpack.c.l.b16 %v115
  %v450 = vunpack.c.l.b16 %v116
  %v451 = vunpack.c.l.b16 %v117
  %v452 = vunpack.c.l.b16 %v118
  %v453 = vunpack.c.l.b16 %v119
  %v454 = vunpack.c.l.b16 %v120
  %v455 = vunpack.c.l.b16 %v121
  %v456 = vunpack.c.l.b16 %v122
  %v457 = vunpack.c.l.b16 %v123
  %v458 = vunpack.c.l.b16 %v124
  %v459 = vunpack.c.l.b16 %v125
  %v460 = vunpack.c.l.b16 %v126
  %v461 = vunpack.c.l.b16 %v127
  %v462 = vunpack.c.l.b16 %v128
  %v463 = vunpack.c.l.b16 %v129
  %v464 = vunpack.c.l.b16 %v130
  %v465 = vunpack.c.l.b16 %v131
  %v466 = vunpack.c.l.b16 %v132
  %v467 = vunpack.c.l.b16 %v133
  %v468 = vunpack.c.l.b16 %v134
  %v469 = vunpack.c.l.b16 %v135
  %v470 = vunpack.c.l.b16 %v136
  %v471 = vunpack.c.l.b16 %v137
  %v472 = vunpack.c.l.b16 %v138
  %v473 = vunpack.c.l.b16 %v139
  %v474 = vunpack.c.l.b16 %v140
  %v475 = vunpack.c.l.b16 %v141
  %v476 = vunpack.c.l.b16 %v142
  %v477 = vunpack.c.l.b16 %v143
  %v478 = vunpack.c.l.b16 %v144
  %v479 = vunpack.c.l.b16 %v145
  %v480 = vunpack.c.l.b16 %v146
  %v481 = vunpack.c.l.b16 %v147
  %v482 = vunpack.c.l.b16 %v148
  %v483 = vunpack.c.l.b16 %v149
  %v484 = vunpack.c.l.b16 %v150
  %v485 = vunpack.c.l.b16 %v151
  %v486 = vunpack.c.l.b16 %v152
  %v487 = vunpack.c.l.b16 %v153
  %v488 = vunpack.c.l.b16 %v154
  %v489 = vunpack.c.l.b16 %v155
  %v490 = vunpack.c.l.b16 %v156
  %v491 = vunpack.c.l.b16 %v157
  %v492 = vunpack.c.l.b16 %v158
  %v493 = vunpack.c.l.b16 %v159
  %v494 = vunpack.c.l.b16 %v160
  %v495 = vunpack.c.l.b16 %v161
  %v496 = vunpack.c.l.b16 %v162
  %v497 = vunpack.c.l.b16 %v163
  %v498 = vunpack.c.l.b16 %v164
  %v499 = vunpack.c.l.b16 %v165
  %v500 = vpack.c.b16 %v357, %v356
  %v501 = vpack.c.b16 %v359, %v358
  %v502 = vpack.c.b16 %v361, %v360
  %v503 = vpack.c.b16 %v363, %v362
  %v504 = vpack.c.b16 %v365, %v364
  %v505 = vpack.c.b16 %v367, %v366
  %v506 = vpack.c.b16 %v369, %v368
  %v507 = vpack.c.b16 %v371, %v370
  %v508 = vpack.c.b16 %v373, %v372
  %v509 = vpack.c.b16 %v375, %v374
  %v510 = vpack.c.b16 %v377, %v376
  %v511 = vpack.c.b16 %v379, %v378
  %v512 = vpack.c.b16 %v381, %v380
  %v513 = vpack.c.b16 %v383, %v382
  %v514 = vpack.c.b16 %v385, %v384
  %v515 = vpack.c.b16 %v387, %v386
  %v516 = vpack.c.b16 %v389, %v388
  %v517 = vpack.c.b16 %v391, %v390
  %v518 = vpack.c.b16 %v393, %v392
  %v519 = vpack.c.b16 %v395, %v394
  %v520 = vpack.c.b16 %v397, %v396
  %v521 = vpack.c.b16 %v399, %v398
  %v522 = vpack.c.b16 %v401, %v400
  %v523 = vpack.c.b16 %v403, %v402
  %v524 = vpack.c.b16 %v405, %v404
  %v525 = vpack.c.b16 %v407, %v406
  %v526 = vpack.c.b16 %v409, %v408
  %v527 = vpack.c.b16 %v411, %v410
  %v528 = vpack.c.b16 %v413, %v412
  %v529 = vpack.c.b16 %v415, %v414
  %v530 = vpack.c.b16 %v417, %v416
  %v531 = vpack.c.b16 %v419, %v418
  %v532 = vpack.c.b16 %v421, %v420
  %v533 = vpack.c.b16 %v423, %v422
  %v534 = vpack.c.b16 %v425, %v424
  %v535 = vpack.c.b16 %v427, %v426
  %v536 = vpack.c.b16 %v429, %v428
  %v537 = vpack.c.b16 %v431, %v430
  %v538 = vpack.c.b16 %v433, %v432
  %v539 = vpack.c.b16 %v435, %v434
  %v540 = vpack.c.b16 %v437, %v436
  %v541 = vpack.c.b16 %v439, %v438
  %v542 = vpack.c.b16 %v441, %v440
  %v543 = vpack.c.b16 %v443, %v442
  %v544 = vpack.c.b16 %v445, %v444
  %v545 = vpack.c.b16 %v447, %v446
  %v546 = vpack.c.b16 %v449, %v448
  %v547 = vpack.c.b16 %v451, %v450
  %v548 = vpack.c.b16 %v453, %v452
  %v549 = vpack.c.b16 %v455, %v454
  %v550 = vpack.c.b16 %v457, %v456
  %v551 = vpack.c.b16 %v459, %v458
  %v552 = vpack.c.b16 %v461, %v460
  %v553 = vpack.c.b16 %v463, %v462
  %v554 = vpack.c.b16 %v465, %v464
  %v555 = vpack.c.b16 %v467, %v466
  %v556 = vpack.c.b16 %v469, %v468
  %v557 = vpack.c.b16 %v471, %v470
  %v558 = vpack.c.b16 %v473, %v472
  %v559 = vpack.c.b16 %v475, %v474
  %v560 = vpack.c.b16 %v477, %v476
  %v561 = vpack.c.b16 %v479, %v478
  %v562 = vpack.c.b16 %v481, %v480
  %v563 = vpack.c.b16 %v483, %v482
  %v564 = vpack.c.b16 %v485, %v484
  %v565 = vpack.c.b16 %v487, %v486
  %v566 = vpack.c.b16 %v489, %v488
  %v567 = vpack.c.b16 %v491, %v490
  %v568 = vpack.c.b16 %v493, %v492
  %v569 = vpack.c.b16 %v495, %v494
  %v570 = vpack.c.b16 %v497, %v496
  %v571 = vpack.c.b16 %v499, %v498
  %644 = vmatprep.subr.bf16.mxu0 0
  %645 = vmatpush1.bf16.msra.mxu0 %v500
  %646 = vmatprep.subr.bf16.mxu0 0
  %647 = vmatpush1.bf16.msra.mxu0 %v501
  %648 = vmatprep.subr.bf16.mxu0 0
  %649 = vmatpush1.bf16.msra.mxu0 %v502
  %650 = vmatprep.subr.bf16.mxu0 0
  %651 = vmatpush1.bf16.msra.mxu0 %v503
  %652 = vmatprep.subr.bf16.mxu0 0
  %653 = vmatpush1.bf16.msra.mxu0 %v504
  %654 = vmatprep.subr.bf16.mxu0 0
  %655 = vmatpush1.bf16.msra.mxu0 %v505
  %656 = vmatprep.subr.bf16.mxu0 0
  %657 = vmatpush1.bf16.msra.mxu0 %v506
  %658 = vmatprep.subr.bf16.mxu0 0
  %659 = vmatpush1.bf16.msra.mxu0 %v507
  %660 = vmatprep.subr.bf16.mxu0 0
  %661 = vmatpush1.bf16.msra.mxu0 %v508
  %662 = vmatprep.subr.bf16.mxu0 0
  %663 = vmatpush1.bf16.msra.mxu0 %v509
  %664 = vmatprep.subr.bf16.mxu0 0
  %665 = vmatpush1.bf16.msra.mxu0 %v510
  %666 = vmatprep.subr.bf16.mxu0 0
  %667 = vmatpush1.bf16.msra.mxu0 %v511
  %668 = vmatprep.subr.bf16.mxu0 0
  %669 = vmatpush1.bf16.msra.mxu0 %v512
  %670 = vmatprep.subr.bf16.mxu0 0
  %671 = vmatpush1.bf16.msra.mxu0 %v513
  %672 = vmatprep.subr.bf16.mxu0 0
  %673 = vmatpush1.bf16.msra.mxu0 %v514
  %674 = vmatprep.subr.bf16.mxu0 0
  %675 = vmatpush1.bf16.msra.mxu0 %v515
  %676 = vmatprep.mubr.bf16.mxu0 %v195
  %677 = vmatmul.mubr.bf16.gmra.mrb[0].mxu0 %v194
  %v678 = vpop.f32.mrb[0].mxu0
  %v679 = vadd.f32 0.0, %v678
  %v680 = vpop.f32.mrb[0].mxu0
  %v681 = vpop.f32.mrb[0].mxu0
  %v682 = vadd.f32 0.0, %v681
  %v683 = vpop.f32.mrb[0].mxu0
  %684 = vdwg.mxu0
  %685 = vmatprep.subr.bf16.mxu0 0
  %686 = vmatpush1.bf16.msra.mxu0 %v516
  %687 = vmatprep.subr.bf16.mxu0 0
  %688 = vmatpush1.bf16.msra.mxu0 %v517
  %689 = vmatprep.subr.bf16.mxu0 0
  %690 = vmatpush1.bf16.msra.mxu0 %v518
  %691 = vmatprep.subr.bf16.mxu0 0
  %692 = vmatpush1.bf16.msra.mxu0 %v519
  %693 = vmatprep.subr.bf16.mxu0 0
  %694 = vmatpush1.bf16.msra.mxu0 %v520
  %695 = vmatprep.subr.bf16.mxu0 0
  %696 = vmatpush1.bf16.msra.mxu0 %v521
  %697 = vmatprep.subr.bf16.mxu0 0
  %698 = vmatpush1.bf16.msra.mxu0 %v522
  %699 = vmatprep.subr.bf16.mxu0 0
  %700 = vmatpush1.bf16.msra.mxu0 %v523
  %701 = vmatprep.subr.bf16.mxu0 0
  %702 = vmatpush1.bf16.msra.mxu0 %v524
  %703 = vmatprep.subr.bf16.mxu0 0
  %704 = vmatpush1.bf16.msra.mxu0 %v525
  %705 = vmatprep.subr.bf16.mxu0 0
  %706 = vmatpush1.bf16.msra.mxu0 %v526
  %707 = vmatprep.subr.bf16.mxu0 0
  %708 = vmatpush1.bf16.msra.mxu0 %v527
  %709 = vmatprep.subr.bf16.mxu0 0
  %710 = vmatpush1.bf16.msra.mxu0 %v528
  %711 = vmatprep.subr.bf16.mxu0 0
  %712 = vmatpush1.bf16.msra.mxu0 %v529
  %713 = vmatprep.subr.bf16.mxu0 0
  %714 = vmatpush1.bf16.msra.mxu0 %v530
  %715 = vmatprep.subr.bf16.mxu0 0
  %716 = vmatpush1.bf16.msra.mxu0 %v531
  %717 = vmatprep.mubr.bf16.mxu0 %v197
  %718 = vmatmul.mubr.bf16.gmra.mrb[0].mxu0 %v196
  %v719 = vpop.f32.mrb[0].mxu0
  %v720 = vadd.f32 %v679, %v719
  %v721 = vpop.f32.mrb[0].mxu0
  %v722 = vpop.f32.mrb[0].mxu0
  %v723 = vadd.f32 %v682, %v722
  %v724 = vpop.f32.mrb[0].mxu0
  %725 = vdwg.mxu0
  %726 = vmatprep.subr.bf16.mxu0 0
  %727 = vmatpush1.bf16.msra.mxu0 %v532
  %728 = vmatprep.subr.bf16.mxu0 0
  %729 = vmatpush1.bf16.msra.mxu0 %v533
  %730 = vmatprep.subr.bf16.mxu0 0
  %731 = vmatpush1.bf16.msra.mxu0 %v534
  %732 = vmatprep.subr.bf16.mxu0 0
  %733 = vmatpush1.bf16.msra.mxu0 %v535
  %734 = vmatprep.subr.bf16.mxu0 0
  %735 = vmatpush1.bf16.msra.mxu0 %v536
  %736 = vmatprep.subr.bf16.mxu0 0
  %737 = vmatpush1.bf16.msra.mxu0 %v537
  %738 = vmatprep.subr.bf16.mxu0 0
  %739 = vmatpush1.bf16.msra.mxu0 %v538
  %740 = vmatprep.subr.bf16.mxu0 0
  %741 = vmatpush1.bf16.msra.mxu0 %v539
  %742 = vmatprep.subr.bf16.mxu0 0
  %743 = vmatpush1.bf16.msra.mxu0 %v540
  %744 = vmatprep.subr.bf16.mxu0 0
  %745 = vmatpush1.bf16.msra.mxu0 %v541
  %746 = vmatprep.subr.bf16.mxu0 0
  %747 = vmatpush1.bf16.msra.mxu0 %v542
  %748 = vmatprep.subr.bf16.mxu0 0
  %749 = vmatpush1.bf16.msra.mxu0 %v543
  %750 = vmatprep.subr.bf16.mxu0 0
  %751 = vmatpush1.bf16.msra.mxu0 %v544
  %752 = vmatprep.subr.bf16.mxu0 0
  %753 = vmatpush1.bf16.msra.mxu0 %v545
  %754 = vmatprep.subr.bf16.mxu0 0
  %755 = vmatpush1.bf16.msra.mxu0 %v546
  %756 = vmatprep.subr.bf16.mxu0 0
  %757 = vmatpush1.bf16.msra.mxu0 %v547
  %758 = vmatprep.mubr.bf16.mxu0 %v199
  %759 = vmatmul.mubr.bf16.gmra.mrb[0].mxu0 %v198
  %v760 = vpop.f32.mrb[0].mxu0
  %v761 = vadd.f32 %v720, %v760
  %v762 = vpop.f32.mrb[0].mxu0
  %v763 = vpop.f32.mrb[0].mxu0
  %v764 = vadd.f32 %v723, %v763
  %v765 = vpop.f32.mrb[0].mxu0
  %766 = vdwg.mxu0
  %767 = vmatprep.subr.bf16.mxu0 0
  %768 = vmatpush1.bf16.msra.mxu0 %v548
  %769 = vmatprep.subr.bf16.mxu0 0
  %770 = vmatpush1.bf16.msra.mxu0 %v549
  %771 = vmatprep.subr.bf16.mxu0 0
  %772 = vmatpush1.bf16.msra.mxu0 %v550
  %773 = vmatprep.subr.bf16.mxu0 0
  %774 = vmatpush1.bf16.msra.mxu0 %v551
  %775 = vmatprep.subr.bf16.mxu0 0
  %776 = vmatpush1.bf16.msra.mxu0 %v552
  %777 = vmatprep.subr.bf16.mxu0 0
  %778 = vmatpush1.bf16.msra.mxu0 %v553
  %779 = vmatprep.subr.bf16.mxu0 0
  %780 = vmatpush1.bf16.msra.mxu0 %v554
  %781 = vmatprep.subr.bf16.mxu0 0
  %782 = vmatpush1.bf16.msra.mxu0 %v555
  %783 = vmatprep.subr.bf16.mxu0 0
  %784 = vmatpush1.bf16.msra.mxu0 %v556
  %785 = vmatprep.subr.bf16.mxu0 0
  %786 = vmatpush1.bf16.msra.mxu0 %v557
  %787 = vmatprep.subr.bf16.mxu0 0
  %788 = vmatpush1.bf16.msra.mxu0 %v558
  %789 = vmatprep.subr.bf16.mxu0 0
  %790 = vmatpush1.bf16.msra.mxu0 %v559
  %791 = vmatprep.subr.bf16.mxu0 0
  %792 = vmatpush1.bf16.msra.mxu0 %v560
  %793 = vmatprep.subr.bf16.mxu0 0
  %794 = vmatpush1.bf16.msra.mxu0 %v561
  %795 = vmatprep.subr.bf16.mxu0 0
  %796 = vmatpush1.bf16.msra.mxu0 %v562
  %797 = vmatprep.subr.bf16.mxu0 0
  %798 = vmatpush1.bf16.msra.mxu0 %v563
  %799 = vmatprep.mubr.bf16.mxu0 %v201
  %800 = vmatmul.mubr.bf16.gmra.mrb[0].mxu0 %v200
  %v801 = vpop.f32.mrb[0].mxu0
  %v802 = vadd.f32 %v761, %v801
  %v803 = vpop.f32.mrb[0].mxu0
  %v804 = vpop.f32.mrb[0].mxu0
  %v805 = vadd.f32 %v764, %v804
  %v806 = vpop.f32.mrb[0].mxu0
  %807 = vdwg.mxu0
  %808 = vmatprep.subr.bf16.mxu0 0
  %809 = vmatpush1.bf16.msra.mxu0 %v564
  %810 = vmatprep.subr.bf16.mxu0 0
  %811 = vmatpush1.bf16.msra.mxu0 %v565
  %812 = vmatprep.subr.bf16.mxu0 0
  %813 = vmatpush1.bf16.msra.mxu0 %v566
  %814 = vmatprep.subr.bf16.mxu0 0
  %815 = vmatpush1.bf16.msra.mxu0 %v567
  %816 = vmatprep.subr.bf16.mxu0 0
  %817 = vmatpush1.bf16.msra.mxu0 %v568
  %818 = vmatprep.subr.bf16.mxu0 0
  %819 = vmatpush1.bf16.msra.mxu0 %v569
  %820 = vmatprep.subr.bf16.mxu0 0
  %821 = vmatpush1.bf16.msra.mxu0 %v570
  %822 = vmatprep.subr.bf16.mxu0 0
  %823 = vmatpush1.bf16.msra.mxu0 %v571
  %824 = vmatprep.subr.bf16.mxu0 0
  %825 = vmatpush1.bf16.msra.mxu0 0
  %826 = vmatprep.subr.bf16.mxu0 0
  %827 = vmatpush1.bf16.msra.mxu0 0
  %828 = vmatprep.subr.bf16.mxu0 0
  %829 = vmatpush1.bf16.msra.mxu0 0
  %830 = vmatprep.subr.bf16.mxu0 0
  %831 = vmatpush1.bf16.msra.mxu0 0
  %832 = vmatprep.subr.bf16.mxu0 0
  %833 = vmatpush1.bf16.msra.mxu0 0
  %834 = vmatprep.subr.bf16.mxu0 0
  %835 = vmatpush1.bf16.msra.mxu0 0
  %836 = vmatprep.subr.bf16.mxu0 0
  %837 = vmatpush1.bf16.msra.mxu0 0
  %838 = vmatprep.subr.bf16.mxu0 0
  %839 = vmatpush1.bf16.msra.mxu0 0
  %840 = vmatprep.mubr.bf16.mxu0 0
  %841 = vmatmul.mubr.bf16.gmra.mrb[0].mxu0 %v202
  %v842 = vpop.f32.mrb[0].mxu0
  %v843 = vadd.f32 %v802, %v842
  %v844 = vpop.f32.mrb[0].mxu0
  %v845 = vpop.f32.mrb[0].mxu0
  %v846 = vadd.f32 %v805, %v845
  %v847 = vpop.f32.mrb[0].mxu0
  %848 = vdwg.mxu0
  %v849 = vadd.f32 %v843, %v846
  %v850 = vrot.slane %v849, 4
  %v851 = vadd.f32 %v849, %v850
  %v852 = vrot.slane %v851, 2
  %v853 = vadd.f32 %v851, %v852
  %v854 = vrot.slane %v853, 1
  %v855 = vadd.f32 %v853, %v854
  %v856 = vmul.f32 %v843, %v843
  %v857 = vmul.f32 %v846, %v846
  %v858 = vadd.f32 %v856, %v857
  %v859 = vrot.slane %v858, 4
  %v860 = vadd.f32 %v858, %v859
  %v861 = vrot.slane %v860, 2
  %v862 = vadd.f32 %v860, %v861
  %v863 = vrot.slane %v862, 1
  %v864 = vadd.f32 %v862, %v863
  %865 = vrot.lane.b32.xlu0 %v855, 8
  %v866 = vpop.permute.xlu0 %865
  %v867 = vadd.f32 %v855, %v866
  %868 = vrot.lane.b32.xlu0 %v864, 8
  %v869 = vpop.permute.xlu0 %868
  %v870 = vadd.f32 %v864, %v869
  %871 = vrot.lane.b32.xlu0 %v867, 16
  %v872 = vpop.permute.xlu0 %871
  %v873 = vadd.f32 %v867, %v872
  %874 = vrot.lane.b32.xlu0 %v870, 16
  %v875 = vpop.permute.xlu0 %874
  %v876 = vadd.f32 %v870, %v875
  %877 = vrot.lane.b32.xlu0 %v873, 32
  %v878 = vpop.permute.xlu0 %877
  %v879 = vadd.f32 %v873, %v878
  %880 = vrot.lane.b32.xlu0 %v876, 32
  %v881 = vpop.permute.xlu0 %880
  %v882 = vadd.f32 %v876, %v881
  %883 = vrot.lane.b32.xlu0 %v879, 64
  %v884 = vpop.permute.xlu0 %883
  %v885 = vadd.f32 %v879, %v884
  %886 = vrot.lane.b32.xlu0 %v882, 64
  %v887 = vpop.permute.xlu0 %886
  %v888 = vadd.f32 %v882, %v887
  %v889 = vmul.f32 %v885, 0.0078125
  %v890 = vmul.f32 %v888, 0.0078125
  %v891 = vmul.f32 %v889, %v889
  %v892 = vsub.f32 %v890, %v891
  %v893 = vadd.f32 %v892, 1e-05
  %v894 = vrsqrt.pop %v893
  %v895 = vlaneseq
  %v896 = vshrl.u32 %v895, 7
  %v897 = vsub.s32 0, %v896
  %v898 = vrot.slane %v889, %v897
  %v899 = vsub.f32 %v843, %v898
  %v900 = vsub.f32 %v846, %v898
  %v901 = vlaneseq
  %v902 = vshrl.u32 %v901, 7
  %v903 = vsub.s32 0, %v902
  %v904 = vrot.slane %v894, %v903
  %v905 = vmul.f32 %v899, %v904
  %v906 = vmul.f32 %v900, %v904
  %vm907 = vcmp.ge.f32.partialorder %v905, 0.0
  %vm908 = vcmp.ge.f32.partialorder %v906, 0.0
  %v909 = vmul.f32 %v905, 0.01
  %v910 = vmul.f32 %v906, 0.01
  %v911 = vsel %vm907, %v905, %v909
  %v912 = vsel %vm908, %v906, %v910
  %v913 = vpack.c.bf16 %v912, %v911
  %v915 = vunpack.c.l.b16 %v913
  %v916 = vunpack.c.h.b16 %v913
  %v917 = vpack.c.b16 %v915, %v915
  %v918 = vpack.c.b16 %v916, %v916
  %921 = vst [vmem:[%s2] sm:$0xf] %v917
  %922 = vst [vmem:[%s2 + $0x4] sm:$0xf] %v918
  // Predicated region
  $region10: #{discrim_block_forward.3} parent=0 // pred_check
    _
  $region11: #{discrim_block_forward.3} parent=0 // pred_check_branch
    %924 = sbr.rel (0) target = $region13
  $region12: #{discrim_block_forward.3} parent=0 // pred_region
    _
  $region13: #{discrim_block_forward.3} parent=0 // pred_fallthru
    _
  // Predicated region
  $region14: #{discrim_block_forward.3} parent=0 // pred_check
    _
  $region15: #{discrim_block_forward.3} parent=0 // pred_check_branch
    %926 = sbr.rel (0) target = $region17
  $region16: #{discrim_block_forward.3} parent=0 // pred_region
    _
  $region17: #{discrim_block_forward.3} parent=0 // pred_fallthru
    _

</llo_original>
